<compile_context>
chip_gen: v5e
topology: v5e:2x2
jax: 0.10.0
libtpu: 0.0.40
codegen_flags: <defaults>
</compile_context>

<pallas_src>
import math

import jax
import jax.numpy as jnp
from jax.experimental import pallas as pl
from jax.experimental.pallas import tpu as pltpu

LN_EPS = 1e-5


def _layernorm(x, g, b):
    # x: (rows, D), g/b: (1, D)
    mu = jnp.mean(x, axis=-1, keepdims=True)
    var = jnp.mean((x - mu) ** 2, axis=-1, keepdims=True)
    return (x - mu) / jnp.sqrt(var + LN_EPS) * g + b


# ---------------------------------------------------------------------------
# Fused kernel: one grid step = (batch item b, decoder layer l)
#   x = x + CrossAttention(LN(x), LN(m))     (Residual2(PreNorm2(...)))
#   x = x + FFN(LN(x))                       (Residual(PreNorm(...)))
# The residual stream lives in `acc_ref` (VMEM, f32) across all layer steps.
# ---------------------------------------------------------------------------
def _decoder_kernel(
    x_ref, m_ref,
    ln1_g_ref, ln1_b_ref, wq_ref, wk_ref, wv_ref, wo_ref, bo_ref,
    ln2_g_ref, ln2_b_ref, w1_ref, b1_ref, w2_ref, b2_ref,
    o_ref, acc_ref,
):
    layer = pl.program_id(1)

    # Layer 0: load the residual stream for this batch item into VMEM scratch.
    @pl.when(layer == 0)
    def _init():
        acc_ref[...] = x_ref[0].astype(jnp.float32)

    x = acc_ref[...]                              # (N, D) f32
    mm = m_ref[0].astype(jnp.float32)             # (Nm, D) f32

    # ---------------- Residual2(PreNorm2(Cross_Attention)) ----------------
    g1 = ln1_g_ref[0]                             # (1, D)
    be1 = ln1_b_ref[0]                            # (1, D)
    xn = _layernorm(x, g1, be1)                   # PreNorm2 shares one LN for x and m
    mn = _layernorm(mm, g1, be1)

    wq = wq_ref[0]                                # (H, D, dh) — dim**-0.5 pre-folded
    wk = wk_ref[0]                                # (H, D, dh)
    wv = wv_ref[0]                                # (H, D, dh)
    wo = wo_ref[0]                                # (H, dh, D)
    H = wq.shape[0]
    N, D = x.shape
    Nm = mm.shape[0]

    # Heads-batched contractions (no per-head loop / transposes / concat).
    xb = jnp.broadcast_to(xn[None], (H, N, D))
    mb = jnp.broadcast_to(mn[None], (H, Nm, D))
    q = jnp.einsum("hnd,hdk->hnk", xb, wq, preferred_element_type=jnp.float32)
    k = jnp.einsum("hmd,hdk->hmk", mb, wk, preferred_element_type=jnp.float32)
    v = jnp.einsum("hmd,hdk->hmk", mb, wv, preferred_element_type=jnp.float32)

    dots = jnp.einsum("hnk,hmk->hnm", q, k, preferred_element_type=jnp.float32)
    dots = dots - jnp.max(dots, axis=-1, keepdims=True)
    e = jnp.exp(dots)
    attn = e * pl.reciprocal(jnp.sum(e, axis=-1, keepdims=True), approx=True)

    ctx = jnp.einsum("hnm,hmk->hnk", attn, v, preferred_element_type=jnp.float32)
    proj = jnp.einsum("hnk,hkd->hnd", ctx, wo, preferred_element_type=jnp.float32)
    x = x + jnp.sum(proj, axis=0) + bo_ref[0]

    # ---------------- Residual(PreNorm(FeedForward)) ----------------
    xn2 = _layernorm(x, ln2_g_ref[0], ln2_b_ref[0])
    h = jnp.dot(xn2, w1_ref[0], preferred_element_type=jnp.float32) + b1_ref[0]
    # exact (erf-based) GELU, as in torch.nn.GELU default
    h = 0.5 * h * (1.0 + jax.lax.erf(h * (1.0 / math.sqrt(2.0))))
    x = x + jnp.dot(h, w2_ref[0], preferred_element_type=jnp.float32) + b2_ref[0]

    acc_ref[...] = x

    @pl.when(layer == pl.num_programs(1) - 1)
    def _finalize():
        o_ref[0] = x.astype(o_ref.dtype)


# ---------------------------------------------------------------------------
# Wrapper: single pallas_call, grid = (B, depth)
# ---------------------------------------------------------------------------
def transformer_decoder(x, m, stacked):
    B, N, D = x.shape
    Nm = m.shape[1]
    depth, H, _, dh = stacked["wq"].shape
    mlp = stacked["w1"].shape[-1]

    xm_map = lambda b, l: (b, 0, 0)       # batch-indexed, layer-invariant
    p3_map = lambda b, l: (l, 0, 0)       # layer-indexed 3D params
    p4_map = lambda b, l: (l, 0, 0, 0)    # layer-indexed 4D (per-head) weights

    return pl.pallas_call(
        _decoder_kernel,
        out_shape=jax.ShapeDtypeStruct((B, N, D), x.dtype),
        grid_spec=pltpu.PrefetchScalarGridSpec(
            num_scalar_prefetch=0,
            grid=(B, depth),
            in_specs=[
                pl.BlockSpec((1, N, D), xm_map),        # x
                pl.BlockSpec((1, Nm, D), xm_map),       # m
                pl.BlockSpec((1, 1, D), p3_map),        # ln1 gamma
                pl.BlockSpec((1, 1, D), p3_map),        # ln1 beta
                pl.BlockSpec((1, H, D, dh), p4_map),    # Wq (scale folded in)
                pl.BlockSpec((1, H, D, dh), p4_map),    # Wk
                pl.BlockSpec((1, H, D, dh), p4_map),    # Wv
                pl.BlockSpec((1, H, dh, D), p4_map),    # Wo
                pl.BlockSpec((1, 1, D), p3_map),        # bo
                pl.BlockSpec((1, 1, D), p3_map),        # ln2 gamma
                pl.BlockSpec((1, 1, D), p3_map),        # ln2 beta
                pl.BlockSpec((1, D, mlp), p3_map),      # W1
                pl.BlockSpec((1, 1, mlp), p3_map),      # b1
                pl.BlockSpec((1, mlp, D), p3_map),      # W2
                pl.BlockSpec((1, 1, D), p3_map),        # b2
            ],
            out_specs=pl.BlockSpec((1, N, D), xm_map),
            scratch_shapes=[pltpu.VMEM((N, D), jnp.float32)],
        ),
        compiler_params=pltpu.CompilerParams(
            dimension_semantics=("parallel", "arbitrary")),
    )(x, m,
      stacked["ln1_g"], stacked["ln1_b"],
      stacked["wq"], stacked["wk"], stacked["wv"], stacked["wo"], stacked["bo"],
      stacked["ln2_g"], stacked["ln2_b"],
      stacked["w1"], stacked["b1"], stacked["w2"], stacked["b2"])


# ---------------------------------------------------------------------------
# One-time parameter preparation (construction-time, not per-call):
#   * stack per-layer params along a leading depth axis
#   * split attention weights per head: Wq/Wk/Wv -> (depth, H, D, dh), Wo -> (depth, H, dh, D)
#   * fold the attention scale (dim**-0.5) into Wq
# ---------------------------------------------------------------------------
def prepare_params(params, *, dim, heads, dim_head):
    scale = float(dim) ** (-0.5)
    stack = lambda name: jnp.stack([p[name] for p in params], axis=0)
    wq = jnp.stack([(p["wq"] * scale).reshape(dim, heads, dim_head).transpose(1, 0, 2)
                    for p in params], axis=0)
    wk = jnp.stack([p["wk"].reshape(dim, heads, dim_head).transpose(1, 0, 2)
                    for p in params], axis=0)
    wv = jnp.stack([p["wv"].reshape(dim, heads, dim_head).transpose(1, 0, 2)
                    for p in params], axis=0)
    wo = jnp.stack([p["wo"].reshape(heads, dim_head, dim) for p in params], axis=0)
    return dict(
        ln1_g=stack("ln1_g"), ln1_b=stack("ln1_b"),
        wq=wq, wk=wk, wv=wv, wo=wo, bo=stack("bo"),
        ln2_g=stack("ln2_g"), ln2_b=stack("ln2_b"),
        w1=stack("w1"), b1=stack("b1"), w2=stack("w2"), b2=stack("b2"),
    )


# ---------------------------------------------------------------------------
# Deterministic parameter init (synthetic; shapes match the PyTorch module)
# ---------------------------------------------------------------------------
def init_params(key, dim, depth, heads, dim_head, mlp_dim):
    inner = heads * dim_head
    params = []
    for layer in range(depth):
        ks = jax.random.split(jax.random.fold_in(key, layer), 9)
        params.append(dict(
            ln1_g=jnp.ones((1, dim), jnp.float32),
            ln1_b=jnp.zeros((1, dim), jnp.float32),
            wq=0.05 * jax.random.normal(ks[0], (dim, inner), jnp.float32),
            wk=0.05 * jax.random.normal(ks[1], (dim, inner), jnp.float32),
            wv=0.05 * jax.random.normal(ks[2], (dim, inner), jnp.float32),
            wo=0.05 * jax.random.normal(ks[3], (inner, dim), jnp.float32),
            bo=0.02 * jax.random.normal(ks[4], (1, dim), jnp.float32),
            ln2_g=jnp.ones((1, dim), jnp.float32),
            ln2_b=jnp.zeros((1, dim), jnp.float32),
            w1=0.05 * jax.random.normal(ks[5], (dim, mlp_dim), jnp.float32),
            b1=0.02 * jax.random.normal(ks[6], (1, mlp_dim), jnp.float32),
            w2=0.05 * jax.random.normal(ks[7], (mlp_dim, dim), jnp.float32),
            b2=0.02 * jax.random.normal(ks[8], (1, dim), jnp.float32),
        ))
    return params


# ---------------------------------------------------------------------------
# Pure-JAX reference (mirrors the PyTorch forward exactly, uses raw params)
# ---------------------------------------------------------------------------
def reference_decoder(x, m, params, *, heads, dim_head):
    dim = x.shape[-1]
    scale = float(dim) ** (-0.5)

    def ln(t, g, b):
        mu = jnp.mean(t, axis=-1, keepdims=True)
        var = jnp.mean((t - mu) ** 2, axis=-1, keepdims=True)
        return (t - mu) / jnp.sqrt(var + LN_EPS) * g + b

    for p in params:
        B, N, _ = x.shape
        Nm = m.shape[1]
        xn = ln(x, p["ln1_g"][0], p["ln1_b"][0])
        mn = ln(m, p["ln1_g"][0], p["ln1_b"][0])
        q = (xn @ p["wq"]).reshape(B, N, heads, dim_head).transpose(0, 2, 1, 3)
        k = (mn @ p["wk"]).reshape(B, Nm, heads, dim_head).transpose(0, 2, 1, 3)
        v = (mn @ p["wv"]).reshape(B, Nm, heads, dim_head).transpose(0, 2, 1, 3)
        dots = jnp.einsum("bhid,bhjd->bhij", q, k) * scale
        attn = jax.nn.softmax(dots, axis=-1)
        out = jnp.einsum("bhij,bhjd->bhid", attn, v)
        out = out.transpose(0, 2, 1, 3).reshape(B, N, heads * dim_head)
        out = out @ p["wo"] + p["bo"][0]
        x = x + out

        xn = ln(x, p["ln2_g"][0], p["ln2_b"][0])
        h = xn @ p["w1"] + p["b1"][0]
        h = 0.5 * h * (1.0 + jax.lax.erf(h / jnp.sqrt(2.0)))
        x = x + (h @ p["w2"] + p["b2"][0])
    return x


if __name__ == "__main__":
    # Small config consistent with TransformerDecoder(dim, depth, heads, dim_head, mlp_dim, dropout)
    DIM, DEPTH, HEADS, DIM_HEAD, MLP_DIM = 32, 2, 4, 8, 64
    B, N, NM = 2, 8, 8

    key = jax.random.PRNGKey(0)
    kx, km, kp = jax.random.split(key, 3)
    x = jax.random.normal(kx, (B, N, DIM), jnp.float32)
    m = jax.random.normal(km, (B, NM, DIM), jnp.float32)
    params = init_params(kp, DIM, DEPTH, HEADS, DIM_HEAD, MLP_DIM)
    stacked = prepare_params(params, dim=DIM, heads=HEADS, dim_head=DIM_HEAD)

    out = transformer_decoder(x, m, stacked)
    out = jax.block_until_ready(out)

    ref = reference_decoder(x, m, params, heads=HEADS, dim_head=DIM_HEAD)
    assert out.shape == (B, N, DIM)
    max_err = float(jnp.max(jnp.abs(out - ref)))
    # 1e-3 tolerance: only difference vs. exact f32 reference is the EUP approx
    # reciprocal in the softmax denominator (all matmuls/LN/residuals stay f32).
    assert jnp.allclose(out, ref, rtol=1e-3, atol=1e-3), max_err

    print("KERNEL_OK")
</pallas_src>

<mosaic_0001>
module attributes {stable_mosaic.version = 11 : i64} {
  func.func @_decoder_kernel(%arg0: i32, %arg1: i32, %arg2: memref<1x8x32xf32, #tpu.memory_space<vmem>>, %arg3: memref<1x8x32xf32, #tpu.memory_space<vmem>>, %arg4: memref<1x1x32xf32, #tpu.memory_space<vmem>>, %arg5: memref<1x1x32xf32, #tpu.memory_space<vmem>>, %arg6: memref<1x4x32x8xf32, #tpu.memory_space<vmem>>, %arg7: memref<1x4x32x8xf32, #tpu.memory_space<vmem>>, %arg8: memref<1x4x32x8xf32, #tpu.memory_space<vmem>>, %arg9: memref<1x4x8x32xf32, #tpu.memory_space<vmem>>, %arg10: memref<1x1x32xf32, #tpu.memory_space<vmem>>, %arg11: memref<1x1x32xf32, #tpu.memory_space<vmem>>, %arg12: memref<1x1x32xf32, #tpu.memory_space<vmem>>, %arg13: memref<1x32x64xf32, #tpu.memory_space<vmem>>, %arg14: memref<1x1x64xf32, #tpu.memory_space<vmem>>, %arg15: memref<1x64x32xf32, #tpu.memory_space<vmem>>, %arg16: memref<1x1x32xf32, #tpu.memory_space<vmem>>, %arg17: memref<1x8x32xf32, #tpu.memory_space<vmem>>, %arg18: memref<8x32xf32, #tpu.memory_space<vmem>>) attributes {dimension_semantics = [#tpu.dimension_semantics<parallel>, #tpu.dimension_semantics<arbitrary>], iteration_bounds = array<i64: 2, 2>, scalar_prefetch = 0 : i64, scratch_operands = 1 : i64, tpu.core_type = #tpu.core_type<tc>, window_params = [{transform_indices = @transform_0, window_bounds = array<i64: 1, 8, 32>}, {transform_indices = @transform_1, window_bounds = array<i64: 1, 8, 32>}, {transform_indices = @transform_2, window_bounds = array<i64: 1, 1, 32>}, {transform_indices = @transform_3, window_bounds = array<i64: 1, 1, 32>}, {transform_indices = @transform_4, window_bounds = array<i64: 1, 4, 32, 8>}, {transform_indices = @transform_5, window_bounds = array<i64: 1, 4, 32, 8>}, {transform_indices = @transform_6, window_bounds = array<i64: 1, 4, 32, 8>}, {transform_indices = @transform_7, window_bounds = array<i64: 1, 4, 8, 32>}, {transform_indices = @transform_8, window_bounds = array<i64: 1, 1, 32>}, {transform_indices = @transform_9, window_bounds = array<i64: 1, 1, 32>}, {transform_indices = @transform_10, window_bounds = array<i64: 1, 1, 32>}, {transform_indices = @transform_11, window_bounds = array<i64: 1, 32, 64>}, {transform_indices = @transform_12, window_bounds = array<i64: 1, 1, 64>}, {transform_indices = @transform_13, window_bounds = array<i64: 1, 64, 32>}, {transform_indices = @transform_14, window_bounds = array<i64: 1, 1, 32>}, {transform_indices = @transform_15, window_bounds = array<i64: 1, 8, 32>}]} {
    %c0_i32 = arith.constant 0 : i32
    %0 = arith.cmpi eq, %arg1, %c0_i32 : i32
    %1 = arith.extui %0 : i1 to i32
    %c0_i32_0 = arith.constant 0 : i32
    %2 = arith.cmpi ne, %1, %c0_i32_0 : i32
    scf.if %2 {
      %c0_79 = arith.constant 0 : index
      %c0_80 = arith.constant 0 : index
      %c0_81 = arith.constant 0 : index
      %143 = vector.load %arg2[%c0_79, %c0_80, %c0_81] : memref<1x8x32xf32, #tpu.memory_space<vmem>>, vector<1x8x32xf32>
      %144 = vector.shape_cast %143 : vector<1x8x32xf32> to vector<8x32xf32>
      %c0_82 = arith.constant 0 : index
      %c0_83 = arith.constant 0 : index
      %145 = vector.load %arg18[%c0_82, %c0_83] : memref<8x32xf32, #tpu.memory_space<vmem>>, vector<8x32xf32>
      tpu.vector_store %arg18[%c0_82, %c0_83], %144 {strides = array<i32>} : memref<8x32xf32, #tpu.memory_space<vmem>>, vector<8x32xf32>,
    } else {
    }
    %c0 = arith.constant 0 : index
    %c0_1 = arith.constant 0 : index
    %3 = vector.load %arg18[%c0, %c0_1] : memref<8x32xf32, #tpu.memory_space<vmem>>, vector<8x32xf32>
    %c0_2 = arith.constant 0 : index
    %c0_3 = arith.constant 0 : index
    %c0_4 = arith.constant 0 : index
    %4 = vector.load %arg3[%c0_2, %c0_3, %c0_4] : memref<1x8x32xf32, #tpu.memory_space<vmem>>, vector<1x8x32xf32>
    %5 = vector.shape_cast %4 : vector<1x8x32xf32> to vector<8x32xf32>
    %c0_5 = arith.constant 0 : index
    %c0_6 = arith.constant 0 : index
    %c0_7 = arith.constant 0 : index
    %6 = vector.load %arg4[%c0_5, %c0_6, %c0_7] : memref<1x1x32xf32, #tpu.memory_space<vmem>>, vector<1x1x32xf32>
    %7 = vector.shape_cast %6 : vector<1x1x32xf32> to vector<1x32xf32>
    %c0_8 = arith.constant 0 : index
    %c0_9 = arith.constant 0 : index
    %c0_10 = arith.constant 0 : index
    %8 = vector.load %arg5[%c0_8, %c0_9, %c0_10] : memref<1x1x32xf32, #tpu.memory_space<vmem>>, vector<1x1x32xf32>
    %9 = vector.shape_cast %8 : vector<1x1x32xf32> to vector<1x32xf32>
    %cst = arith.constant dense<0.000000e+00> : vector<8xf32>
    %10 = vector.multi_reduction <add>, %3, %cst [1] : vector<8x32xf32> to vector<8xf32>
    %11 = vector.shape_cast %10 : vector<8xf32> to vector<8x1xf32>
    %cst_11 = arith.constant 3.200000e+01 : f32
    %12 = vector.broadcast %cst_11 : f32 to vector<8x1xf32>
    %13 = arith.divf %11, %12 : vector<8x1xf32>
    %14 = vector.broadcast %13 : vector<8x1xf32> to vector<8x32xf32>
    %15 = arith.subf %3, %14 : vector<8x32xf32>
    %16 = arith.mulf %15, %15 : vector<8x32xf32>
    %cst_12 = arith.constant dense<0.000000e+00> : vector<8xf32>
    %17 = vector.multi_reduction <add>, %16, %cst_12 [1] : vector<8x32xf32> to vector<8xf32>
    %18 = vector.shape_cast %17 : vector<8xf32> to vector<8x1xf32>
    %cst_13 = arith.constant 3.200000e+01 : f32
    %19 = vector.broadcast %cst_13 : f32 to vector<8x1xf32>
    %20 = arith.divf %18, %19 : vector<8x1xf32>
    %21 = vector.broadcast %13 : vector<8x1xf32> to vector<8x32xf32>
    %22 = arith.subf %3, %21 : vector<8x32xf32>
    %cst_14 = arith.constant 9.99999974E-6 : f32
    %23 = vector.broadcast %cst_14 : f32 to vector<8x1xf32>
    %24 = arith.addf %20, %23 : vector<8x1xf32>
    %25 = math.sqrt %24 : vector<8x1xf32>
    %26 = vector.broadcast %25 : vector<8x1xf32> to vector<8x32xf32>
    %27 = arith.divf %22, %26 : vector<8x32xf32>
    %28 = vector.broadcast %7 : vector<1x32xf32> to vector<8x32xf32>
    %29 = arith.mulf %27, %28 : vector<8x32xf32>
    %30 = vector.broadcast %9 : vector<1x32xf32> to vector<8x32xf32>
    %31 = arith.addf %29, %30 : vector<8x32xf32>
    %cst_15 = arith.constant dense<0.000000e+00> : vector<8xf32>
    %32 = vector.multi_reduction <add>, %5, %cst_15 [1] : vector<8x32xf32> to vector<8xf32>
    %33 = vector.shape_cast %32 : vector<8xf32> to vector<8x1xf32>
    %cst_16 = arith.constant 3.200000e+01 : f32
    %34 = vector.broadcast %cst_16 : f32 to vector<8x1xf32>
    %35 = arith.divf %33, %34 : vector<8x1xf32>
    %36 = vector.broadcast %35 : vector<8x1xf32> to vector<8x32xf32>
    %37 = arith.subf %5, %36 : vector<8x32xf32>
    %38 = arith.mulf %37, %37 : vector<8x32xf32>
    %cst_17 = arith.constant dense<0.000000e+00> : vector<8xf32>
    %39 = vector.multi_reduction <add>, %38, %cst_17 [1] : vector<8x32xf32> to vector<8xf32>
    %40 = vector.shape_cast %39 : vector<8xf32> to vector<8x1xf32>
    %cst_18 = arith.constant 3.200000e+01 : f32
    %41 = vector.broadcast %cst_18 : f32 to vector<8x1xf32>
    %42 = arith.divf %40, %41 : vector<8x1xf32>
    %43 = vector.broadcast %35 : vector<8x1xf32> to vector<8x32xf32>
    %44 = arith.subf %5, %43 : vector<8x32xf32>
    %cst_19 = arith.constant 9.99999974E-6 : f32
    %45 = vector.broadcast %cst_19 : f32 to vector<8x1xf32>
    %46 = arith.addf %42, %45 : vector<8x1xf32>
    %47 = math.sqrt %46 : vector<8x1xf32>
    %48 = vector.broadcast %47 : vector<8x1xf32> to vector<8x32xf32>
    %49 = arith.divf %44, %48 : vector<8x32xf32>
    %50 = vector.broadcast %7 : vector<1x32xf32> to vector<8x32xf32>
    %51 = arith.mulf %49, %50 : vector<8x32xf32>
    %52 = vector.broadcast %9 : vector<1x32xf32> to vector<8x32xf32>
    %53 = arith.addf %51, %52 : vector<8x32xf32>
    %c0_20 = arith.constant 0 : index
    %c0_21 = arith.constant 0 : index
    %c0_22 = arith.constant 0 : index
    %c0_23 = arith.constant 0 : index
    %54 = vector.load %arg6[%c0_20, %c0_21, %c0_22, %c0_23] : memref<1x4x32x8xf32, #tpu.memory_space<vmem>>, vector<1x4x32x8xf32>
    %55 = vector.shape_cast %54 : vector<1x4x32x8xf32> to vector<4x32x8xf32>
    %c0_24 = arith.constant 0 : index
    %c0_25 = arith.constant 0 : index
    %c0_26 = arith.constant 0 : index
    %c0_27 = arith.constant 0 : index
    %56 = vector.load %arg7[%c0_24, %c0_25, %c0_26, %c0_27] : memref<1x4x32x8xf32, #tpu.memory_space<vmem>>, vector<1x4x32x8xf32>
    %57 = vector.shape_cast %56 : vector<1x4x32x8xf32> to vector<4x32x8xf32>
    %c0_28 = arith.constant 0 : index
    %c0_29 = arith.constant 0 : index
    %c0_30 = arith.constant 0 : index
    %c0_31 = arith.constant 0 : index
    %58 = vector.load %arg8[%c0_28, %c0_29, %c0_30, %c0_31] : memref<1x4x32x8xf32, #tpu.memory_space<vmem>>, vector<1x4x32x8xf32>
    %59 = vector.shape_cast %58 : vector<1x4x32x8xf32> to vector<4x32x8xf32>
    %c0_32 = arith.constant 0 : index
    %c0_33 = arith.constant 0 : index
    %c0_34 = arith.constant 0 : index
    %c0_35 = arith.constant 0 : index
    %60 = vector.load %arg9[%c0_32, %c0_33, %c0_34, %c0_35] : memref<1x4x8x32xf32, #tpu.memory_space<vmem>>, vector<1x4x8x32xf32>
    %61 = vector.shape_cast %60 : vector<1x4x8x32xf32> to vector<4x8x32xf32>
    %62 = vector.shape_cast %31 : vector<8x32xf32> to vector<1x8x32xf32>
    %63 = vector.shape_cast %62 : vector<1x8x32xf32> to vector<1x8x32xf32>
    %64 = vector.broadcast %63 : vector<1x8x32xf32> to vector<4x8x32xf32>
    %65 = vector.shape_cast %53 : vector<8x32xf32> to vector<1x8x32xf32>
    %66 = vector.shape_cast %65 : vector<1x8x32xf32> to vector<1x8x32xf32>
    %67 = vector.broadcast %66 : vector<1x8x32xf32> to vector<4x8x32xf32>
    "tpu.trace_start"() <{level = 10 : i32, message = "hnd,hdk->hnk"}> : () -> ()
    %cst_36 = arith.constant dense<0.000000e+00> : vector<4x8x8xf32>
    %68 = tpu.matmul %64, %55, %cst_36 {dimension_numbers = #tpu.dot_dimension_numbers<[2], [1], [1], [2], [0, 0, 0, 1, 1, 2], [0], [0]>} : vector<4x8x32xf32>, vector<4x32x8xf32>, vector<4x8x8xf32> -> vector<4x8x8xf32>
    "tpu.trace_stop"() : () -> ()
    "tpu.trace_start"() <{level = 10 : i32, message = "hmd,hdk->hmk"}> : () -> ()
    %cst_37 = arith.constant dense<0.000000e+00> : vector<4x8x8xf32>
    %69 = tpu.matmul %67, %57, %cst_37 {dimension_numbers = #tpu.dot_dimension_numbers<[2], [1], [1], [2], [0, 0, 0, 1, 1, 2], [0], [0]>} : vector<4x8x32xf32>, vector<4x32x8xf32>, vector<4x8x8xf32> -> vector<4x8x8xf32>
    %cst_38 = arith.constant dense<0.000000e+00> : vector<4x8x8xf32>
    %70 = tpu.matmul %67, %59, %cst_38 {dimension_numbers = #tpu.dot_dimension_numbers<[2], [1], [1], [2], [0, 0, 0, 1, 1, 2], [0], [0]>} : vector<4x8x32xf32>, vector<4x32x8xf32>, vector<4x8x8xf32> -> vector<4x8x8xf32>
    "tpu.trace_stop"() : () -> ()
    "tpu.trace_start"() <{level = 10 : i32, message = "hnk,hmk->hnm"}> : () -> ()
    %cst_39 = arith.constant dense<0.000000e+00> : vector<4x8x8xf32>
    %71 = tpu.matmul %68, %69, %cst_39 {dimension_numbers = #tpu.dot_dimension_numbers<[2], [2], [1], [1], [0, 0, 0, 1, 1, 1], [0], [0]>} : vector<4x8x8xf32>, vector<4x8x8xf32>, vector<4x8x8xf32> -> vector<4x8x8xf32>
    "tpu.trace_stop"() : () -> ()
    %cst_40 = arith.constant dense<0xFF800000> : vector<4x8xf32>
    %72 = vector.multi_reduction <maximumf>, %71, %cst_40 [2] : vector<4x8x8xf32> to vector<4x8xf32>
    %73 = vector.shape_cast %72 : vector<4x8xf32> to vector<4x8x1xf32>
    %74 = vector.broadcast %73 : vector<4x8x1xf32> to vector<4x8x8xf32>
    %75 = arith.subf %71, %74 : vector<4x8x8xf32>
    %76 = math.exp %75 : vector<4x8x8xf32>
    %cst_41 = arith.constant dense<0.000000e+00> : vector<4x8xf32>
    %77 = vector.multi_reduction <add>, %76, %cst_41 [2] : vector<4x8x8xf32> to vector<4x8xf32>
    %78 = vector.shape_cast %77 : vector<4x8xf32> to vector<4x8x1xf32>
    %79 = tpu.reciprocal %78 {approx = true} : vector<4x8x1xf32> -> vector<4x8x1xf32>
    %80 = vector.broadcast %79 : vector<4x8x1xf32> to vector<4x8x8xf32>
    %81 = arith.mulf %76, %80 : vector<4x8x8xf32>
    "tpu.trace_start"() <{level = 10 : i32, message = "hnm,hmk->hnk"}> : () -> ()
    %cst_42 = arith.constant dense<0.000000e+00> : vector<4x8x8xf32>
    %82 = tpu.matmul %81, %70, %cst_42 {dimension_numbers = #tpu.dot_dimension_numbers<[2], [1], [1], [2], [0, 0, 0, 1, 1, 2], [0], [0]>} : vector<4x8x8xf32>, vector<4x8x8xf32>, vector<4x8x8xf32> -> vector<4x8x8xf32>
    "tpu.trace_stop"() : () -> ()
    "tpu.trace_start"() <{level = 10 : i32, message = "hnk,hkd->hnd"}> : () -> ()
    %cst_43 = arith.constant dense<0.000000e+00> : vector<4x8x32xf32>
    %83 = tpu.matmul %82, %61, %cst_43 {dimension_numbers = #tpu.dot_dimension_numbers<[2], [1], [1], [2], [0, 0, 0, 1, 1, 2], [0], [0]>} : vector<4x8x8xf32>, vector<4x8x32xf32>, vector<4x8x32xf32> -> vector<4x8x32xf32>
    "tpu.trace_stop"() : () -> ()
    %cst_44 = arith.constant dense<0.000000e+00> : vector<8x32xf32>
    %84 = vector.multi_reduction <add>, %83, %cst_44 [0] : vector<4x8x32xf32> to vector<8x32xf32>
    %85 = arith.addf %3, %84 : vector<8x32xf32>
    %c0_45 = arith.constant 0 : index
    %c0_46 = arith.constant 0 : index
    %c0_47 = arith.constant 0 : index
    %86 = vector.load %arg10[%c0_45, %c0_46, %c0_47] : memref<1x1x32xf32, #tpu.memory_space<vmem>>, vector<1x1x32xf32>
    %87 = vector.shape_cast %86 : vector<1x1x32xf32> to vector<1x32xf32>
    %88 = vector.broadcast %87 : vector<1x32xf32> to vector<8x32xf32>
    %89 = arith.addf %85, %88 : vector<8x32xf32>
    %c0_48 = arith.constant 0 : index
    %c0_49 = arith.constant 0 : index
    %c0_50 = arith.constant 0 : index
    %90 = vector.load %arg11[%c0_48, %c0_49, %c0_50] : memref<1x1x32xf32, #tpu.memory_space<vmem>>, vector<1x1x32xf32>
    %91 = vector.shape_cast %90 : vector<1x1x32xf32> to vector<1x32xf32>
    %c0_51 = arith.constant 0 : index
    %c0_52 = arith.constant 0 : index
    %c0_53 = arith.constant 0 : index
    %92 = vector.load %arg12[%c0_51, %c0_52, %c0_53] : memref<1x1x32xf32, #tpu.memory_space<vmem>>, vector<1x1x32xf32>
    %93 = vector.shape_cast %92 : vector<1x1x32xf32> to vector<1x32xf32>
    %cst_54 = arith.constant dense<0.000000e+00> : vector<8xf32>
    %94 = vector.multi_reduction <add>, %89, %cst_54 [1] : vector<8x32xf32> to vector<8xf32>
    %95 = vector.shape_cast %94 : vector<8xf32> to vector<8x1xf32>
    %cst_55 = arith.constant 3.200000e+01 : f32
    %96 = vector.broadcast %cst_55 : f32 to vector<8x1xf32>
    %97 = arith.divf %95, %96 : vector<8x1xf32>
    %98 = vector.broadcast %97 : vector<8x1xf32> to vector<8x32xf32>
    %99 = arith.subf %89, %98 : vector<8x32xf32>
    %100 = arith.mulf %99, %99 : vector<8x32xf32>
    %cst_56 = arith.constant dense<0.000000e+00> : vector<8xf32>
    %101 = vector.multi_reduction <add>, %100, %cst_56 [1] : vector<8x32xf32> to vector<8xf32>
    %102 = vector.shape_cast %101 : vector<8xf32> to vector<8x1xf32>
    %cst_57 = arith.constant 3.200000e+01 : f32
    %103 = vector.broadcast %cst_57 : f32 to vector<8x1xf32>
    %104 = arith.divf %102, %103 : vector<8x1xf32>
    %105 = vector.broadcast %97 : vector<8x1xf32> to vector<8x32xf32>
    %106 = arith.subf %89, %105 : vector<8x32xf32>
    %cst_58 = arith.constant 9.99999974E-6 : f32
    %107 = vector.broadcast %cst_58 : f32 to vector<8x1xf32>
    %108 = arith.addf %104, %107 : vector<8x1xf32>
    %109 = math.sqrt %108 : vector<8x1xf32>
    %110 = vector.broadcast %109 : vector<8x1xf32> to vector<8x32xf32>
    %111 = arith.divf %106, %110 : vector<8x32xf32>
    %112 = vector.broadcast %91 : vector<1x32xf32> to vector<8x32xf32>
    %113 = arith.mulf %111, %112 : vector<8x32xf32>
    %114 = vector.broadcast %93 : vector<1x32xf32> to vector<8x32xf32>
    %115 = arith.addf %113, %114 : vector<8x32xf32>
    %c0_59 = arith.constant 0 : index
    %c0_60 = arith.constant 0 : index
    %c0_61 = arith.constant 0 : index
    %116 = vector.load %arg13[%c0_59, %c0_60, %c0_61] : memref<1x32x64xf32, #tpu.memory_space<vmem>>, vector<1x32x64xf32>
    %117 = vector.shape_cast %116 : vector<1x32x64xf32> to vector<32x64xf32>
    %cst_62 = arith.constant dense<0.000000e+00> : vector<8x64xf32>
    %118 = tpu.matmul %115, %117, %cst_62 {dimension_numbers = #tpu.dot_dimension_numbers<[1], [0], [0], [1], [0, 0, 1, 1], [], []>} : vector<8x32xf32>, vector<32x64xf32>, vector<8x64xf32> -> vector<8x64xf32>
    %c0_63 = arith.constant 0 : index
    %c0_64 = arith.constant 0 : index
    %c0_65 = arith.constant 0 : index
    %119 = vector.load %arg14[%c0_63, %c0_64, %c0_65] : memref<1x1x64xf32, #tpu.memory_space<vmem>>, vector<1x1x64xf32>
    %120 = vector.shape_cast %119 : vector<1x1x64xf32> to vector<1x64xf32>
    %121 = vector.broadcast %120 : vector<1x64xf32> to vector<8x64xf32>
    %122 = arith.addf %118, %121 : vector<8x64xf32>
    %cst_66 = arith.constant 5.000000e-01 : f32
    %123 = vector.broadcast %cst_66 : f32 to vector<8x64xf32>
    %124 = arith.mulf %123, %122 : vector<8x64xf32>
    %cst_67 = arith.constant 0.707106769 : f32
    %125 = vector.broadcast %cst_67 : f32 to vector<8x64xf32>
    %126 = arith.mulf %122, %125 : vector<8x64xf32>
    %127 = math.erf %126 : vector<8x64xf32>
    %cst_68 = arith.constant 1.000000e+00 : f32
    %128 = vector.broadcast %cst_68 : f32 to vector<8x64xf32>
    %129 = arith.addf %128, %127 : vector<8x64xf32>
    %130 = arith.mulf %124, %129 : vector<8x64xf32>
    %c0_69 = arith.constant 0 : index
    %c0_70 = arith.constant 0 : index
    %c0_71 = arith.constant 0 : index
    %131 = vector.load %arg15[%c0_69, %c0_70, %c0_71] : memref<1x64x32xf32, #tpu.memory_space<vmem>>, vector<1x64x32xf32>
    %132 = vector.shape_cast %131 : vector<1x64x32xf32> to vector<64x32xf32>
    %cst_72 = arith.constant dense<0.000000e+00> : vector<8x32xf32>
    %133 = tpu.matmul %130, %132, %cst_72 {dimension_numbers = #tpu.dot_dimension_numbers<[1], [0], [0], [1], [0, 0, 1, 1], [], []>} : vector<8x64xf32>, vector<64x32xf32>, vector<8x32xf32> -> vector<8x32xf32>
    %134 = arith.addf %89, %133 : vector<8x32xf32>
    %c0_73 = arith.constant 0 : index
    %c0_74 = arith.constant 0 : index
    %c0_75 = arith.constant 0 : index
    %135 = vector.load %arg16[%c0_73, %c0_74, %c0_75] : memref<1x1x32xf32, #tpu.memory_space<vmem>>, vector<1x1x32xf32>
    %136 = vector.shape_cast %135 : vector<1x1x32xf32> to vector<1x32xf32>
    %137 = vector.broadcast %136 : vector<1x32xf32> to vector<8x32xf32>
    %138 = arith.addf %134, %137 : vector<8x32xf32>
    %c0_76 = arith.constant 0 : index
    %c0_77 = arith.constant 0 : index
    %139 = vector.load %arg18[%c0_76, %c0_77] : memref<8x32xf32, #tpu.memory_space<vmem>>, vector<8x32xf32>
    tpu.vector_store %arg18[%c0_76, %c0_77], %138 {strides = array<i32>} : memref<8x32xf32, #tpu.memory_space<vmem>>, vector<8x32xf32>,
    %c1_i32 = arith.constant 1 : i32
    %140 = arith.cmpi eq, %arg1, %c1_i32 : i32
    %141 = arith.extui %140 : i1 to i32
    %c0_i32_78 = arith.constant 0 : i32
    %142 = arith.cmpi ne, %141, %c0_i32_78 : i32
    scf.if %142 {
      %c0_79 = arith.constant 0 : index
      %c0_80 = arith.constant 0 : index
      %c0_81 = arith.constant 0 : index
      %143 = vector.load %arg17[%c0_79, %c0_80, %c0_81] : memref<1x8x32xf32, #tpu.memory_space<vmem>>, vector<1x8x32xf32>
      %144 = vector.shape_cast %143 : vector<1x8x32xf32> to vector<8x32xf32>
      %145 = vector.shape_cast %138 : vector<8x32xf32> to vector<1x8x32xf32>
      tpu.vector_store %arg17[%c0_79, %c0_80, %c0_81], %145 {strides = array<i32>} : memref<1x8x32xf32, #tpu.memory_space<vmem>>, vector<1x8x32xf32>,
    } else {
    }
    return
  }
  func.func @transform_0(%arg0: i32, %arg1: i32) -> (i32, i32, i32) {
    %c0_i32 = arith.constant 0 : i32
    %c0_i32_0 = arith.constant 0 : i32
    %c0_i32_1 = arith.constant 0 : i32
    return %arg0, %c0_i32, %c0_i32_0 : i32, i32, i32
  }
  func.func @transform_1(%arg0: i32, %arg1: i32) -> (i32, i32, i32) {
    %c0_i32 = arith.constant 0 : i32
    %c0_i32_0 = arith.constant 0 : i32
    %c0_i32_1 = arith.constant 0 : i32
    return %arg0, %c0_i32, %c0_i32_0 : i32, i32, i32
  }
  func.func @transform_2(%arg0: i32, %arg1: i32) -> (i32, i32, i32) {
    %c0_i32 = arith.constant 0 : i32
    %c0_i32_0 = arith.constant 0 : i32
    %c0_i32_1 = arith.constant 0 : i32
    return %arg1, %c0_i32, %c0_i32_0 : i32, i32, i32
  }
  func.func @transform_3(%arg0: i32, %arg1: i32) -> (i32, i32, i32) {
    %c0_i32 = arith.constant 0 : i32
    %c0_i32_0 = arith.constant 0 : i32
    %c0_i32_1 = arith.constant 0 : i32
    return %arg1, %c0_i32, %c0_i32_0 : i32, i32, i32
  }
  func.func @transform_4(%arg0: i32, %arg1: i32) -> (i32, i32, i32, i32) {
    %c0_i32 = arith.constant 0 : i32
    %c0_i32_0 = arith.constant 0 : i32
    %c0_i32_1 = arith.constant 0 : i32
    %c0_i32_2 = arith.constant 0 : i32
    return %arg1, %c0_i32, %c0_i32_0, %c0_i32_1 : i32, i32, i32, i32
  }
  func.func @transform_5(%arg0: i32, %arg1: i32) -> (i32, i32, i32, i32) {
    %c0_i32 = arith.constant 0 : i32
    %c0_i32_0 = arith.constant 0 : i32
    %c0_i32_1 = arith.constant 0 : i32
    %c0_i32_2 = arith.constant 0 : i32
    return %arg1, %c0_i32, %c0_i32_0, %c0_i32_1 : i32, i32, i32, i32
  }
  func.func @transform_6(%arg0: i32, %arg1: i32) -> (i32, i32, i32, i32) {
    %c0_i32 = arith.constant 0 : i32
    %c0_i32_0 = arith.constant 0 : i32
    %c0_i32_1 = arith.constant 0 : i32
    %c0_i32_2 = arith.constant 0 : i32
    return %arg1, %c0_i32, %c0_i32_0, %c0_i32_1 : i32, i32, i32, i32
  }
  func.func @transform_7(%arg0: i32, %arg1: i32) -> (i32, i32, i32, i32) {
    %c0_i32 = arith.constant 0 : i32
    %c0_i32_0 = arith.constant 0 : i32
    %c0_i32_1 = arith.constant 0 : i32
    %c0_i32_2 = arith.constant 0 : i32
    return %arg1, %c0_i32, %c0_i32_0, %c0_i32_1 : i32, i32, i32, i32
  }
  func.func @transform_8(%arg0: i32, %arg1: i32) -> (i32, i32, i32) {
    %c0_i32 = arith.constant 0 : i32
    %c0_i32_0 = arith.constant 0 : i32
    %c0_i32_1 = arith.constant 0 : i32
    return %arg1, %c0_i32, %c0_i32_0 : i32, i32, i32
  }
  func.func @transform_9(%arg0: i32, %arg1: i32) -> (i32, i32, i32) {
    %c0_i32 = arith.constant 0 : i32
    %c0_i32_0 = arith.constant 0 : i32
    %c0_i32_1 = arith.constant 0 : i32
    return %arg1, %c0_i32, %c0_i32_0 : i32, i32, i32
  }
  func.func @transform_10(%arg0: i32, %arg1: i32) -> (i32, i32, i32) {
    %c0_i32 = arith.constant 0 : i32
    %c0_i32_0 = arith.constant 0 : i32
    %c0_i32_1 = arith.constant 0 : i32
    return %arg1, %c0_i32, %c0_i32_0 : i32, i32, i32
  }
  func.func @transform_11(%arg0: i32, %arg1: i32) -> (i32, i32, i32) {
    %c0_i32 = arith.constant 0 : i32
    %c0_i32_0 = arith.constant 0 : i32
    %c0_i32_1 = arith.constant 0 : i32
    return %arg1, %c0_i32, %c0_i32_0 : i32, i32, i32
  }
  func.func @transform_12(%arg0: i32, %arg1: i32) -> (i32, i32, i32) {
    %c0_i32 = arith.constant 0 : i32
    %c0_i32_0 = arith.constant 0 : i32
    %c0_i32_1 = arith.constant 0 : i32
    return %arg1, %c0_i32, %c0_i32_0 : i32, i32, i32
  }
  func.func @transform_13(%arg0: i32, %arg1: i32) -> (i32, i32, i32) {
    %c0_i32 = arith.constant 0 : i32
    %c0_i32_0 = arith.constant 0 : i32
    %c0_i32_1 = arith.constant 0 : i32
    return %arg1, %c0_i32, %c0_i32_0 : i32, i32, i32
  }
  func.func @transform_14(%arg0: i32, %arg1: i32) -> (i32, i32, i32) {
    %c0_i32 = arith.constant 0 : i32
    %c0_i32_0 = arith.constant 0 : i32
    %c0_i32_1 = arith.constant 0 : i32
    return %arg1, %c0_i32, %c0_i32_0 : i32, i32, i32
  }
  func.func @transform_15(%arg0: i32, %arg1: i32) -> (i32, i32, i32) {
    %c0_i32 = arith.constant 0 : i32
    %c0_i32_0 = arith.constant 0 : i32
    %c0_i32_1 = arith.constant 0 : i32
    return %arg0, %c0_i32, %c0_i32_0 : i32, i32, i32
  }
}

</mosaic_0001>

<llo_original>
// kernel: tpu_custom_call.1
$region0: #{tpu_custom_call.1}
  #allocation0 [shape = 'u32[]', space=smem, size = 0x4, offset = 0x4, fixed_abs, tag = 'smem constant byte address 0x4 - core index']
  #allocation1 [shape = 'u32[72,128]{1,0:T(1,128)}', space=vmem, size = 0x9000, scoped, tag = 'internal scratch']
  #allocation2 [shape = 'f32[8,32]{1,0:T(8,128)}', space=vmem, size = 0x1000, scoped, tag = 'scratch operand']
  %s0 = inlined_call_operand.vmem [shape: f32[2,8,32], index: 0, kind: input, shape index: {}]
  %s1 = inlined_call_operand.vmem [shape: f32[2,8,32], index: 1, kind: input, shape index: {}]
  %s2 = inlined_call_operand.vmem [shape: f32[2,1,32], index: 2, kind: input, shape index: {}]
  %s3 = inlined_call_operand.vmem [shape: f32[2,1,32], index: 3, kind: input, shape index: {}]
  %s4 = inlined_call_operand.vmem [shape: f32[2,4,32,8], index: 4, kind: input, shape index: {}]
  %s5 = inlined_call_operand.vmem [shape: f32[2,4,32,8], index: 5, kind: input, shape index: {}]
  %s6 = inlined_call_operand.vmem [shape: f32[2,4,32,8], index: 6, kind: input, shape index: {}]
  %s7 = inlined_call_operand.vmem [shape: f32[2,4,8,32], index: 7, kind: input, shape index: {}]
  %s8 = inlined_call_operand.vmem [shape: f32[2,1,32], index: 8, kind: input, shape index: {}]
  %s9 = inlined_call_operand.vmem [shape: f32[2,1,32], index: 9, kind: input, shape index: {}]
  %s10 = inlined_call_operand.vmem [shape: f32[2,1,32], index: 10, kind: input, shape index: {}]
  %s11 = inlined_call_operand.vmem [shape: f32[2,32,64], index: 11, kind: input, shape index: {}]
  %s12 = inlined_call_operand.vmem [shape: f32[2,1,64], index: 12, kind: input, shape index: {}]
  %s13 = inlined_call_operand.vmem [shape: f32[2,64,32], index: 13, kind: input, shape index: {}]
  %s14 = inlined_call_operand.vmem [shape: f32[2,1,32], index: 14, kind: input, shape index: {}]
  %s15 = inlined_call_operand.hbm [shape: f32[2,8,32], index: 15, kind: output, shape index: {}]
  %s16 = sld [smem:[#allocation0]]
  $region101: #{tpu_custom_call.1} parent=0
    _
  %s18 = ssub.s32 1, %s16
  %s19 = scalar_select 0, %s18, %s16
  $region1: #{tpu_custom_call.1} parent=0
    #allocation3 [shape = 'u8[8192]{0}', space=vmem, size = 0x2000, scoped, tag = 'output window, operand 0']
    #allocation4 [shape = 's32[2]{0}', space=sflag, size = 0x8, scoped, tag = 'scoped memory for tpu_custom_call.1']
    %20 = vsyncpa [#allocation4], 0
    %s21 = scalar_lea.sflag [#allocation4], 1
    %22 = vsyncpa %s21, 0
    loop: start=0, step=1, limit=6
    $region2: #{tpu_custom_call.1} parent=1 // loop_pre_header
      _
    $region3: #{tpu_custom_call.1} parent=1 // loop_header
      %s24 = sphi 0, %s28
      %p25 = scmp.ge.s32.totalorder %s24, 6
      %s31 = sphi 0, %s43
      %s32 = sphi 0, %s39
      %s33 = sphi 0, %s31
      %s34 = sphi 0, %s32
      %s35 = sphi 0, %s33
      %s36 = sphi 0, %s34
      %s46 = sphi 0, %s48
      %s49 = sphi 0, %s46
      %s50 = sphi 0, %s49
      %s66 = sphi 0, %s50
      %s72 = sphi 0, %s74
      %s75 = sphi 0, %s72
      %s76 = sphi 0, %s75
      %s92 = sphi 0, %s76
      %s98 = sphi 0, %s100
      %s101 = sphi 0, %s98
      %s102 = sphi 0, %s101
      %s118 = sphi 0, %s102
      %s124 = sphi 0, %s126
      %s127 = sphi 0, %s124
      %s128 = sphi 0, %s127
      %s144 = sphi 0, %s128
      %s150 = sphi 0, %s152
      %s153 = sphi 0, %s150
      %s154 = sphi 0, %s153
      %s170 = sphi 0, %s154
      %s176 = sphi 0, %s178
      %s179 = sphi 0, %s176
      %s180 = sphi 0, %s179
      %s196 = sphi 0, %s180
      %s202 = sphi 0, %s204
      %s205 = sphi 0, %s202
      %s206 = sphi 0, %s205
      %s222 = sphi 0, %s206
      %s228 = sphi 0, %s230
      %s231 = sphi 0, %s228
      %s232 = sphi 0, %s231
      %s248 = sphi 0, %s232
      %s254 = sphi 0, %s256
      %s257 = sphi 0, %s254
      %s258 = sphi 0, %s257
      %s274 = sphi 0, %s258
      %s280 = sphi 0, %s282
      %s283 = sphi 0, %s280
      %s284 = sphi 0, %s283
      %s300 = sphi 0, %s284
      %s306 = sphi 0, %s308
      %s309 = sphi 0, %s306
      %s310 = sphi 0, %s309
      %s326 = sphi 0, %s310
      %s332 = sphi 0, %s334
      %s335 = sphi 0, %s332
      %s336 = sphi 0, %s335
      %s352 = sphi 0, %s336
      %s358 = sphi 0, %s360
      %s361 = sphi 0, %s358
      %s362 = sphi 0, %s361
      %s378 = sphi 0, %s362
      %s384 = sphi 0, %s386
      %s387 = sphi 0, %s384
      %s388 = sphi 0, %s387
      %s404 = sphi 0, %s388
      %s410 = sphi 0, %s412
      %s413 = sphi 0, %s410
      %s414 = sphi 0, %s413
      %s430 = sphi 0, %s414
      %s436 = sphi 0, %s438
      %s439 = sphi 0, %s436
      %s440 = sphi 0, %s439
      %s456 = sphi 0, %s440
    $region4: #{tpu_custom_call.1} parent=1 // loop_header_branch
      %27 = sbr.rel (%p25) target = $region8
    $region5: #{tpu_custom_call.1} parent=1 // loop_body
      %s29 = ssub.s32 %s24, 1
      %s30 = ssub.s32 %s24, 2
      %s37 = sadd.s32 1, %s32
      %p38 = scmp.ge.s32.totalorder %s37, 2
      %s39 = scalar_select %p38, 0, %s37
      %s40 = sadd.s32 1, %s31
      %s41 = scalar_select %p38, %s40, %s31
      %p42 = scmp.ge.s32.totalorder %s41, 2
      %s43 = scalar_select %p42, 0, %s41
      %s44 = ssub.s32 %s31, %s43
      %p45 = scmp.eq.s32.totalorder %s44, 0
      %s47 = sadd.s32 %s46, 1
      %s48 = scalar_select %p45, %s46, %s47
      %p51 = pneg %p45
      %p52 = scmp.eq.s32.totalorder %s24, 3
      %p53 = por %p51, %p52
      %p54 = scmp.ne.s32.totalorder %s46, %s49
      %p55 = scmp.eq.s32.totalorder %s24, 0
      %p56 = por %p54, %p55
      %p57 = scmp.ne.s32.totalorder %s46, %s49
      %p58 = scmp.eq.s32.totalorder %s29, 3
      %p59 = por %p57, %p58
      %p60 = scmp.ne.s32.totalorder %s49, %s50
      %p61 = scmp.eq.s32.totalorder %s29, 0
      %p62 = por %p60, %p61
      %p63 = scmp.ne.s32.totalorder %s49, %s50
      %p64 = scmp.eq.s32.totalorder %s30, 3
      %p65 = por %p63, %p64
      %p67 = scmp.ne.s32.totalorder %s50, %s66
      %p68 = scmp.eq.s32.totalorder %s30, 0
      %p69 = por %p67, %p68
      %s70 = ssub.s32 %s31, %s43
      %p71 = scmp.eq.s32.totalorder %s70, 0
      %s73 = sadd.s32 %s72, 1
      %s74 = scalar_select %p71, %s72, %s73
      %p77 = pneg %p71
      %p78 = scmp.eq.s32.totalorder %s24, 3
      %p79 = por %p77, %p78
      %p80 = scmp.ne.s32.totalorder %s72, %s75
      %p81 = scmp.eq.s32.totalorder %s24, 0
      %p82 = por %p80, %p81
      %p83 = scmp.ne.s32.totalorder %s72, %s75
      %p84 = scmp.eq.s32.totalorder %s29, 3
      %p85 = por %p83, %p84
      %p86 = scmp.ne.s32.totalorder %s75, %s76
      %p87 = scmp.eq.s32.totalorder %s29, 0
      %p88 = por %p86, %p87
      %p89 = scmp.ne.s32.totalorder %s75, %s76
      %p90 = scmp.eq.s32.totalorder %s30, 3
      %p91 = por %p89, %p90
      %p93 = scmp.ne.s32.totalorder %s76, %s92
      %p94 = scmp.eq.s32.totalorder %s30, 0
      %p95 = por %p93, %p94
      %s96 = ssub.s32 %s32, %s39
      %p97 = scmp.eq.s32.totalorder %s96, 0
      %s99 = sadd.s32 %s98, 1
      %s100 = scalar_select %p97, %s98, %s99
      %p103 = pneg %p97
      %p104 = scmp.eq.s32.totalorder %s24, 3
      %p105 = por %p103, %p104
      %p106 = scmp.ne.s32.totalorder %s98, %s101
      %p107 = scmp.eq.s32.totalorder %s24, 0
      %p108 = por %p106, %p107
      %p109 = scmp.ne.s32.totalorder %s98, %s101
      %p110 = scmp.eq.s32.totalorder %s29, 3
      %p111 = por %p109, %p110
      %p112 = scmp.ne.s32.totalorder %s101, %s102
      %p113 = scmp.eq.s32.totalorder %s29, 0
      %p114 = por %p112, %p113
      %p115 = scmp.ne.s32.totalorder %s101, %s102
      %p116 = scmp.eq.s32.totalorder %s30, 3
      %p117 = por %p115, %p116
      %p119 = scmp.ne.s32.totalorder %s102, %s118
      %p120 = scmp.eq.s32.totalorder %s30, 0
      %p121 = por %p119, %p120
      %s122 = ssub.s32 %s32, %s39
      %p123 = scmp.eq.s32.totalorder %s122, 0
      %s125 = sadd.s32 %s124, 1
      %s126 = scalar_select %p123, %s124, %s125
      %p129 = pneg %p123
      %p130 = scmp.eq.s32.totalorder %s24, 3
      %p131 = por %p129, %p130
      %p132 = scmp.ne.s32.totalorder %s124, %s127
      %p133 = scmp.eq.s32.totalorder %s24, 0
      %p134 = por %p132, %p133
      %p135 = scmp.ne.s32.totalorder %s124, %s127
      %p136 = scmp.eq.s32.totalorder %s29, 3
      %p137 = por %p135, %p136
      %p138 = scmp.ne.s32.totalorder %s127, %s128
      %p139 = scmp.eq.s32.totalorder %s29, 0
      %p140 = por %p138, %p139
      %p141 = scmp.ne.s32.totalorder %s127, %s128
      %p142 = scmp.eq.s32.totalorder %s30, 3
      %p143 = por %p141, %p142
      %p145 = scmp.ne.s32.totalorder %s128, %s144
      %p146 = scmp.eq.s32.totalorder %s30, 0
      %p147 = por %p145, %p146
      %s148 = ssub.s32 %s32, %s39
      %p149 = scmp.eq.s32.totalorder %s148, 0
      %s151 = sadd.s32 %s150, 1
      %s152 = scalar_select %p149, %s150, %s151
      %p155 = pneg %p149
      %p156 = scmp.eq.s32.totalorder %s24, 3
      %p157 = por %p155, %p156
      %p158 = scmp.ne.s32.totalorder %s150, %s153
      %p159 = scmp.eq.s32.totalorder %s24, 0
      %p160 = por %p158, %p159
      %p161 = scmp.ne.s32.totalorder %s150, %s153
      %p162 = scmp.eq.s32.totalorder %s29, 3
      %p163 = por %p161, %p162
      %p164 = scmp.ne.s32.totalorder %s153, %s154
      %p165 = scmp.eq.s32.totalorder %s29, 0
      %p166 = por %p164, %p165
      %p167 = scmp.ne.s32.totalorder %s153, %s154
      %p168 = scmp.eq.s32.totalorder %s30, 3
      %p169 = por %p167, %p168
      %p171 = scmp.ne.s32.totalorder %s154, %s170
      %p172 = scmp.eq.s32.totalorder %s30, 0
      %p173 = por %p171, %p172
      %s174 = ssub.s32 %s32, %s39
      %p175 = scmp.eq.s32.totalorder %s174, 0
      %s177 = sadd.s32 %s176, 1
      %s178 = scalar_select %p175, %s176, %s177
      %p181 = pneg %p175
      %p182 = scmp.eq.s32.totalorder %s24, 3
      %p183 = por %p181, %p182
      %p184 = scmp.ne.s32.totalorder %s176, %s179
      %p185 = scmp.eq.s32.totalorder %s24, 0
      %p186 = por %p184, %p185
      %p187 = scmp.ne.s32.totalorder %s176, %s179
      %p188 = scmp.eq.s32.totalorder %s29, 3
      %p189 = por %p187, %p188
      %p190 = scmp.ne.s32.totalorder %s179, %s180
      %p191 = scmp.eq.s32.totalorder %s29, 0
      %p192 = por %p190, %p191
      %p193 = scmp.ne.s32.totalorder %s179, %s180
      %p194 = scmp.eq.s32.totalorder %s30, 3
      %p195 = por %p193, %p194
      %p197 = scmp.ne.s32.totalorder %s180, %s196
      %p198 = scmp.eq.s32.totalorder %s30, 0
      %p199 = por %p197, %p198
      %s200 = ssub.s32 %s32, %s39
      %p201 = scmp.eq.s32.totalorder %s200, 0
      %s203 = sadd.s32 %s202, 1
      %s204 = scalar_select %p201, %s202, %s203
      %p207 = pneg %p201
      %p208 = scmp.eq.s32.totalorder %s24, 3
      %p209 = por %p207, %p208
      %p210 = scmp.ne.s32.totalorder %s202, %s205
      %p211 = scmp.eq.s32.totalorder %s24, 0
      %p212 = por %p210, %p211
      %p213 = scmp.ne.s32.totalorder %s202, %s205
      %p214 = scmp.eq.s32.totalorder %s29, 3
      %p215 = por %p213, %p214
      %p216 = scmp.ne.s32.totalorder %s205, %s206
      %p217 = scmp.eq.s32.totalorder %s29, 0
      %p218 = por %p216, %p217
      %p219 = scmp.ne.s32.totalorder %s205, %s206
      %p220 = scmp.eq.s32.totalorder %s30, 3
      %p221 = por %p219, %p220
      %p223 = scmp.ne.s32.totalorder %s206, %s222
      %p224 = scmp.eq.s32.totalorder %s30, 0
      %p225 = por %p223, %p224
      %s226 = ssub.s32 %s32, %s39
      %p227 = scmp.eq.s32.totalorder %s226, 0
      %s229 = sadd.s32 %s228, 1
      %s230 = scalar_select %p227, %s228, %s229
      %p233 = pneg %p227
      %p234 = scmp.eq.s32.totalorder %s24, 3
      %p235 = por %p233, %p234
      %p236 = scmp.ne.s32.totalorder %s228, %s231
      %p237 = scmp.eq.s32.totalorder %s24, 0
      %p238 = por %p236, %p237
      %p239 = scmp.ne.s32.totalorder %s228, %s231
      %p240 = scmp.eq.s32.totalorder %s29, 3
      %p241 = por %p239, %p240
      %p242 = scmp.ne.s32.totalorder %s231, %s232
      %p243 = scmp.eq.s32.totalorder %s29, 0
      %p244 = por %p242, %p243
      %p245 = scmp.ne.s32.totalorder %s231, %s232
      %p246 = scmp.eq.s32.totalorder %s30, 3
      %p247 = por %p245, %p246
      %p249 = scmp.ne.s32.totalorder %s232, %s248
      %p250 = scmp.eq.s32.totalorder %s30, 0
      %p251 = por %p249, %p250
      %s252 = ssub.s32 %s32, %s39
      %p253 = scmp.eq.s32.totalorder %s252, 0
      %s255 = sadd.s32 %s254, 1
      %s256 = scalar_select %p253, %s254, %s255
      %p259 = pneg %p253
      %p260 = scmp.eq.s32.totalorder %s24, 3
      %p261 = por %p259, %p260
      %p262 = scmp.ne.s32.totalorder %s254, %s257
      %p263 = scmp.eq.s32.totalorder %s24, 0
      %p264 = por %p262, %p263
      %p265 = scmp.ne.s32.totalorder %s254, %s257
      %p266 = scmp.eq.s32.totalorder %s29, 3
      %p267 = por %p265, %p266
      %p268 = scmp.ne.s32.totalorder %s257, %s258
      %p269 = scmp.eq.s32.totalorder %s29, 0
      %p270 = por %p268, %p269
      %p271 = scmp.ne.s32.totalorder %s257, %s258
      %p272 = scmp.eq.s32.totalorder %s30, 3
      %p273 = por %p271, %p272
      %p275 = scmp.ne.s32.totalorder %s258, %s274
      %p276 = scmp.eq.s32.totalorder %s30, 0
      %p277 = por %p275, %p276
      %s278 = ssub.s32 %s32, %s39
      %p279 = scmp.eq.s32.totalorder %s278, 0
      %s281 = sadd.s32 %s280, 1
      %s282 = scalar_select %p279, %s280, %s281
      %p285 = pneg %p279
      %p286 = scmp.eq.s32.totalorder %s24, 3
      %p287 = por %p285, %p286
      %p288 = scmp.ne.s32.totalorder %s280, %s283
      %p289 = scmp.eq.s32.totalorder %s24, 0
      %p290 = por %p288, %p289
      %p291 = scmp.ne.s32.totalorder %s280, %s283
      %p292 = scmp.eq.s32.totalorder %s29, 3
      %p293 = por %p291, %p292
      %p294 = scmp.ne.s32.totalorder %s283, %s284
      %p295 = scmp.eq.s32.totalorder %s29, 0
      %p296 = por %p294, %p295
      %p297 = scmp.ne.s32.totalorder %s283, %s284
      %p298 = scmp.eq.s32.totalorder %s30, 3
      %p299 = por %p297, %p298
      %p301 = scmp.ne.s32.totalorder %s284, %s300
      %p302 = scmp.eq.s32.totalorder %s30, 0
      %p303 = por %p301, %p302
      %s304 = ssub.s32 %s32, %s39
      %p305 = scmp.eq.s32.totalorder %s304, 0
      %s307 = sadd.s32 %s306, 1
      %s308 = scalar_select %p305, %s306, %s307
      %p311 = pneg %p305
      %p312 = scmp.eq.s32.totalorder %s24, 3
      %p313 = por %p311, %p312
      %p314 = scmp.ne.s32.totalorder %s306, %s309
      %p315 = scmp.eq.s32.totalorder %s24, 0
      %p316 = por %p314, %p315
      %p317 = scmp.ne.s32.totalorder %s306, %s309
      %p318 = scmp.eq.s32.totalorder %s29, 3
      %p319 = por %p317, %p318
      %p320 = scmp.ne.s32.totalorder %s309, %s310
      %p321 = scmp.eq.s32.totalorder %s29, 0
      %p322 = por %p320, %p321
      %p323 = scmp.ne.s32.totalorder %s309, %s310
      %p324 = scmp.eq.s32.totalorder %s30, 3
      %p325 = por %p323, %p324
      %p327 = scmp.ne.s32.totalorder %s310, %s326
      %p328 = scmp.eq.s32.totalorder %s30, 0
      %p329 = por %p327, %p328
      %s330 = ssub.s32 %s32, %s39
      %p331 = scmp.eq.s32.totalorder %s330, 0
      %s333 = sadd.s32 %s332, 1
      %s334 = scalar_select %p331, %s332, %s333
      %p337 = pneg %p331
      %p338 = scmp.eq.s32.totalorder %s24, 3
      %p339 = por %p337, %p338
      %p340 = scmp.ne.s32.totalorder %s332, %s335
      %p341 = scmp.eq.s32.totalorder %s24, 0
      %p342 = por %p340, %p341
      %p343 = scmp.ne.s32.totalorder %s332, %s335
      %p344 = scmp.eq.s32.totalorder %s29, 3
      %p345 = por %p343, %p344
      %p346 = scmp.ne.s32.totalorder %s335, %s336
      %p347 = scmp.eq.s32.totalorder %s29, 0
      %p348 = por %p346, %p347
      %p349 = scmp.ne.s32.totalorder %s335, %s336
      %p350 = scmp.eq.s32.totalorder %s30, 3
      %p351 = por %p349, %p350
      %p353 = scmp.ne.s32.totalorder %s336, %s352
      %p354 = scmp.eq.s32.totalorder %s30, 0
      %p355 = por %p353, %p354
      %s356 = ssub.s32 %s32, %s39
      %p357 = scmp.eq.s32.totalorder %s356, 0
      %s359 = sadd.s32 %s358, 1
      %s360 = scalar_select %p357, %s358, %s359
      %p363 = pneg %p357
      %p364 = scmp.eq.s32.totalorder %s24, 3
      %p365 = por %p363, %p364
      %p366 = scmp.ne.s32.totalorder %s358, %s361
      %p367 = scmp.eq.s32.totalorder %s24, 0
      %p368 = por %p366, %p367
      %p369 = scmp.ne.s32.totalorder %s358, %s361
      %p370 = scmp.eq.s32.totalorder %s29, 3
      %p371 = por %p369, %p370
      %p372 = scmp.ne.s32.totalorder %s361, %s362
      %p373 = scmp.eq.s32.totalorder %s29, 0
      %p374 = por %p372, %p373
      %p375 = scmp.ne.s32.totalorder %s361, %s362
      %p376 = scmp.eq.s32.totalorder %s30, 3
      %p377 = por %p375, %p376
      %p379 = scmp.ne.s32.totalorder %s362, %s378
      %p380 = scmp.eq.s32.totalorder %s30, 0
      %p381 = por %p379, %p380
      %s382 = ssub.s32 %s32, %s39
      %p383 = scmp.eq.s32.totalorder %s382, 0
      %s385 = sadd.s32 %s384, 1
      %s386 = scalar_select %p383, %s384, %s385
      %p389 = pneg %p383
      %p390 = scmp.eq.s32.totalorder %s24, 3
      %p391 = por %p389, %p390
      %p392 = scmp.ne.s32.totalorder %s384, %s387
      %p393 = scmp.eq.s32.totalorder %s24, 0
      %p394 = por %p392, %p393
      %p395 = scmp.ne.s32.totalorder %s384, %s387
      %p396 = scmp.eq.s32.totalorder %s29, 3
      %p397 = por %p395, %p396
      %p398 = scmp.ne.s32.totalorder %s387, %s388
      %p399 = scmp.eq.s32.totalorder %s29, 0
      %p400 = por %p398, %p399
      %p401 = scmp.ne.s32.totalorder %s387, %s388
      %p402 = scmp.eq.s32.totalorder %s30, 3
      %p403 = por %p401, %p402
      %p405 = scmp.ne.s32.totalorder %s388, %s404
      %p406 = scmp.eq.s32.totalorder %s30, 0
      %p407 = por %p405, %p406
      %s408 = ssub.s32 %s32, %s39
      %p409 = scmp.eq.s32.totalorder %s408, 0
      %s411 = sadd.s32 %s410, 1
      %s412 = scalar_select %p409, %s410, %s411
      %p415 = pneg %p409
      %p416 = scmp.eq.s32.totalorder %s24, 3
      %p417 = por %p415, %p416
      %p418 = scmp.ne.s32.totalorder %s410, %s413
      %p419 = scmp.eq.s32.totalorder %s24, 0
      %p420 = por %p418, %p419
      %p421 = scmp.ne.s32.totalorder %s410, %s413
      %p422 = scmp.eq.s32.totalorder %s29, 3
      %p423 = por %p421, %p422
      %p424 = scmp.ne.s32.totalorder %s413, %s414
      %p425 = scmp.eq.s32.totalorder %s29, 0
      %p426 = por %p424, %p425
      %p427 = scmp.ne.s32.totalorder %s413, %s414
      %p428 = scmp.eq.s32.totalorder %s30, 3
      %p429 = por %p427, %p428
      %p431 = scmp.ne.s32.totalorder %s414, %s430
      %p432 = scmp.eq.s32.totalorder %s30, 0
      %p433 = por %p431, %p432
      %s434 = ssub.s32 %s31, %s43
      %p435 = scmp.eq.s32.totalorder %s434, 0
      %s437 = sadd.s32 %s436, 1
      %s438 = scalar_select %p435, %s436, %s437
      %p441 = pneg %p435
      %p442 = scmp.eq.s32.totalorder %s24, 3
      %p443 = por %p441, %p442
      %p444 = scmp.ne.s32.totalorder %s436, %s439
      %p445 = scmp.eq.s32.totalorder %s24, 0
      %p446 = por %p444, %p445
      %p447 = scmp.ne.s32.totalorder %s436, %s439
      %p448 = scmp.eq.s32.totalorder %s29, 3
      %p449 = por %p447, %p448
      %p450 = scmp.ne.s32.totalorder %s439, %s440
      %p451 = scmp.eq.s32.totalorder %s29, 0
      %p452 = por %p450, %p451
      %p453 = scmp.ne.s32.totalorder %s439, %s440
      %p454 = scmp.eq.s32.totalorder %s30, 3
      %p455 = por %p453, %p454
      %p457 = scmp.ne.s32.totalorder %s440, %s456
      %p458 = scmp.eq.s32.totalorder %s30, 0
      %p459 = por %p457, %p458
      %p460 = scmp.le.s32.totalorder 1, %s24
      %p461 = scmp.lt.s32.totalorder %s24, 5
      %p462 = pnand %p460, %p461
      %p463 = pneg %p462
      // Predicated region
      $region9: #{tpu_custom_call.1} parent=5 // pred_check
        _
      $region10: #{tpu_custom_call.1} parent=5 // pred_check_branch
        %465 = sbr.rel (%p462) target = $region12
      $region11: #{tpu_custom_call.1} parent=5 // pred_region
        %s466 = ssub.s32 %s24, 1
      $region12: #{tpu_custom_call.1} parent=5 // pred_fallthru
        _
      %p467 = scmp.lt.s32.totalorder %s24, 4
      // Predicated region
      $region13: #{tpu_custom_call.1} parent=5 // pred_check
        %p468 = pneg %p467
      $region14: #{tpu_custom_call.1} parent=5 // pred_check_branch
        %470 = sbr.rel (%p468) target = $region16
      $region15: #{tpu_custom_call.1} parent=5 // pred_region
        // Predicated region
        $region17: #{tpu_custom_call.1} parent=15 // pred_check
          %p471 = pneg %p56
        $region18: #{tpu_custom_call.1} parent=15 // pred_check_branch
          %473 = sbr.rel (%p471) target = $region20
        $region19: #{tpu_custom_call.1} parent=15 // pred_region
          %p474 = scmp.lt.s32.totalorder %s31, 1
          %s475 = scalar_select %p474, %s31, 1
          %s476 = smul.addr %s475, 8
          %s477 = scalar_lea.vmem %s0, %s476
        $region20: #{tpu_custom_call.1} parent=15 // pred_fallthru
          _
        // Predicated region
        $region21: #{tpu_custom_call.1} parent=15 // pred_check
          %p478 = pneg %p82
        $region22: #{tpu_custom_call.1} parent=15 // pred_check_branch
          %480 = sbr.rel (%p478) target = $region24
        $region23: #{tpu_custom_call.1} parent=15 // pred_region
          %p481 = scmp.lt.s32.totalorder %s31, 1
          %s482 = scalar_select %p481, %s31, 1
          %s483 = smul.addr %s482, 8
          %s484 = scalar_lea.vmem %s1, %s483
        $region24: #{tpu_custom_call.1} parent=15 // pred_fallthru
          _
        // Predicated region
        $region25: #{tpu_custom_call.1} parent=15 // pred_check
          %p485 = pneg %p108
        $region26: #{tpu_custom_call.1} parent=15 // pred_check_branch
          %487 = sbr.rel (%p485) target = $region28
        $region27: #{tpu_custom_call.1} parent=15 // pred_region
          %p488 = scmp.lt.s32.totalorder %s32, 1
          %s489 = scalar_select %p488, %s32, 1
          %s490 = scalar_lea.vmem %s2, %s489
        $region28: #{tpu_custom_call.1} parent=15 // pred_fallthru
          _
        // Predicated region
        $region29: #{tpu_custom_call.1} parent=15 // pred_check
          %p491 = pneg %p134
        $region30: #{tpu_custom_call.1} parent=15 // pred_check_branch
          %493 = sbr.rel (%p491) target = $region32
        $region31: #{tpu_custom_call.1} parent=15 // pred_region
          %p494 = scmp.lt.s32.totalorder %s32, 1
          %s495 = scalar_select %p494, %s32, 1
          %s496 = scalar_lea.vmem %s3, %s495
        $region32: #{tpu_custom_call.1} parent=15 // pred_fallthru
          _
        // Predicated region
        $region33: #{tpu_custom_call.1} parent=15 // pred_check
          %p497 = pneg %p160
        $region34: #{tpu_custom_call.1} parent=15 // pred_check_branch
          %499 = sbr.rel (%p497) target = $region36
        $region35: #{tpu_custom_call.1} parent=15 // pred_region
          %p500 = scmp.lt.s32.totalorder %s32, 1
          %s501 = scalar_select %p500, %s32, 1
          %s502 = smul.addr %s501, 16
          %s503 = smul.addr %s502, 8
          %s504 = scalar_lea.vmem %s4, %s503
        $region36: #{tpu_custom_call.1} parent=15 // pred_fallthru
          _
        // Predicated region
        $region37: #{tpu_custom_call.1} parent=15 // pred_check
          %p505 = pneg %p186
        $region38: #{tpu_custom_call.1} parent=15 // pred_check_branch
          %507 = sbr.rel (%p505) target = $region40
        $region39: #{tpu_custom_call.1} parent=15 // pred_region
          %p508 = scmp.lt.s32.totalorder %s32, 1
          %s509 = scalar_select %p508, %s32, 1
          %s510 = smul.addr %s509, 16
          %s511 = smul.addr %s510, 8
          %s512 = scalar_lea.vmem %s5, %s511
        $region40: #{tpu_custom_call.1} parent=15 // pred_fallthru
          _
        // Predicated region
        $region41: #{tpu_custom_call.1} parent=15 // pred_check
          %p513 = pneg %p212
        $region42: #{tpu_custom_call.1} parent=15 // pred_check_branch
          %515 = sbr.rel (%p513) target = $region44
        $region43: #{tpu_custom_call.1} parent=15 // pred_region
          %p516 = scmp.lt.s32.totalorder %s32, 1
          %s517 = scalar_select %p516, %s32, 1
          %s518 = smul.addr %s517, 16
          %s519 = smul.addr %s518, 8
          %s520 = scalar_lea.vmem %s6, %s519
        $region44: #{tpu_custom_call.1} parent=15 // pred_fallthru
          _
        // Predicated region
        $region45: #{tpu_custom_call.1} parent=15 // pred_check
          %p521 = pneg %p238
        $region46: #{tpu_custom_call.1} parent=15 // pred_check_branch
          %523 = sbr.rel (%p521) target = $region48
        $region47: #{tpu_custom_call.1} parent=15 // pred_region
          %p524 = scmp.lt.s32.totalorder %s32, 1
          %s525 = scalar_select %p524, %s32, 1
          %s526 = smul.addr %s525, 4
          %s527 = smul.addr %s526, 8
          %s528 = scalar_lea.vmem %s7, %s527
        $region48: #{tpu_custom_call.1} parent=15 // pred_fallthru
          _
        // Predicated region
        $region49: #{tpu_custom_call.1} parent=15 // pred_check
          %p529 = pneg %p264
        $region50: #{tpu_custom_call.1} parent=15 // pred_check_branch
          %531 = sbr.rel (%p529) target = $region52
        $region51: #{tpu_custom_call.1} parent=15 // pred_region
          %p532 = scmp.lt.s32.totalorder %s32, 1
          %s533 = scalar_select %p532, %s32, 1
          %s534 = scalar_lea.vmem %s8, %s533
        $region52: #{tpu_custom_call.1} parent=15 // pred_fallthru
          _
        // Predicated region
        $region53: #{tpu_custom_call.1} parent=15 // pred_check
          %p535 = pneg %p290
        $region54: #{tpu_custom_call.1} parent=15 // pred_check_branch
          %537 = sbr.rel (%p535) target = $region56
        $region55: #{tpu_custom_call.1} parent=15 // pred_region
          %p538 = scmp.lt.s32.totalorder %s32, 1
          %s539 = scalar_select %p538, %s32, 1
          %s540 = scalar_lea.vmem %s9, %s539
        $region56: #{tpu_custom_call.1} parent=15 // pred_fallthru
          _
        // Predicated region
        $region57: #{tpu_custom_call.1} parent=15 // pred_check
          %p541 = pneg %p316
        $region58: #{tpu_custom_call.1} parent=15 // pred_check_branch
          %543 = sbr.rel (%p541) target = $region60
        $region59: #{tpu_custom_call.1} parent=15 // pred_region
          %p544 = scmp.lt.s32.totalorder %s32, 1
          %s545 = scalar_select %p544, %s32, 1
          %s546 = scalar_lea.vmem %s10, %s545
        $region60: #{tpu_custom_call.1} parent=15 // pred_fallthru
          _
        // Predicated region
        $region61: #{tpu_custom_call.1} parent=15 // pred_check
          %p547 = pneg %p342
        $region62: #{tpu_custom_call.1} parent=15 // pred_check_branch
          %549 = sbr.rel (%p547) target = $region64
        $region63: #{tpu_custom_call.1} parent=15 // pred_region
          %p550 = scmp.lt.s32.totalorder %s32, 1
          %s551 = scalar_select %p550, %s32, 1
          %s552 = smul.addr %s551, 4
          %s553 = smul.addr %s552, 8
          %s554 = scalar_lea.vmem %s11, %s553
        $region64: #{tpu_custom_call.1} parent=15 // pred_fallthru
          _
        // Predicated region
        $region65: #{tpu_custom_call.1} parent=15 // pred_check
          %p555 = pneg %p368
        $region66: #{tpu_custom_call.1} parent=15 // pred_check_branch
          %557 = sbr.rel (%p555) target = $region68
        $region67: #{tpu_custom_call.1} parent=15 // pred_region
          %p558 = scmp.lt.s32.totalorder %s32, 1
          %s559 = scalar_select %p558, %s32, 1
          %s560 = scalar_lea.vmem %s12, %s559
        $region68: #{tpu_custom_call.1} parent=15 // pred_fallthru
          _
        // Predicated region
        $region69: #{tpu_custom_call.1} parent=15 // pred_check
          %p561 = pneg %p394
        $region70: #{tpu_custom_call.1} parent=15 // pred_check_branch
          %563 = sbr.rel (%p561) target = $region72
        $region71: #{tpu_custom_call.1} parent=15 // pred_region
          %p564 = scmp.lt.s32.totalorder %s32, 1
          %s565 = scalar_select %p564, %s32, 1
          %s566 = smul.addr %s565, 8
          %s567 = smul.addr %s566, 8
          %s568 = scalar_lea.vmem %s13, %s567
        $region72: #{tpu_custom_call.1} parent=15 // pred_fallthru
          _
        // Predicated region
        $region73: #{tpu_custom_call.1} parent=15 // pred_check
          %p569 = pneg %p420
        $region74: #{tpu_custom_call.1} parent=15 // pred_check_branch
          %571 = sbr.rel (%p569) target = $region76
        $region75: #{tpu_custom_call.1} parent=15 // pred_region
          %p572 = scmp.lt.s32.totalorder %s32, 1
          %s573 = scalar_select %p572, %s32, 1
          %s574 = scalar_lea.vmem %s14, %s573
        $region76: #{tpu_custom_call.1} parent=15 // pred_fallthru
          _
      $region16: #{tpu_custom_call.1} parent=5 // pred_fallthru
        _
      %p575 = scmp.le.s32.totalorder 1, %s24
      %p576 = scmp.lt.s32.totalorder %s24, 5
      %p577 = pnand %p575, %p576
      %p578 = pneg %p577
      // Predicated region
      $region77: #{tpu_custom_call.1} parent=5 // pred_check
        _
      $region78: #{tpu_custom_call.1} parent=5 // pred_check_branch
        %580 = sbr.rel (%p577) target = $region80
      $region79: #{tpu_custom_call.1} parent=5 // pred_region
        %s581 = ssub.s32 %s24, 1
        %p582 = scmp.lt.s32.totalorder %s33, 1
        %s583 = scalar_select %p582, %s33, 1
        %s584 = smul.addr %s583, 8
        %s585 = scalar_lea.vmem %s0, %s584
        %p586 = pneg %p62
        %p587 = pneg %p59
        %p588 = scmp.lt.s32.totalorder %s33, 1
        %s589 = scalar_select %p588, %s33, 1
        %s590 = smul.addr %s589, 8
        %s591 = scalar_lea.vmem %s1, %s590
        %p592 = pneg %p88
        %p593 = pneg %p85
        %p594 = scmp.lt.s32.totalorder %s34, 1
        %s595 = scalar_select %p594, %s34, 1
        %s596 = scalar_lea.vmem %s2, %s595
        %p597 = pneg %p114
        %p598 = pneg %p111
        %p599 = scmp.lt.s32.totalorder %s34, 1
        %s600 = scalar_select %p599, %s34, 1
        %s601 = scalar_lea.vmem %s3, %s600
        %p602 = pneg %p140
        %p603 = pneg %p137
        %p604 = scmp.lt.s32.totalorder %s34, 1
        %s605 = scalar_select %p604, %s34, 1
        %s606 = smul.addr %s605, 16
        %s607 = smul.addr %s606, 8
        %s608 = scalar_lea.vmem %s4, %s607
        %p609 = pneg %p166
        %p610 = pneg %p163
        %p611 = scmp.lt.s32.totalorder %s34, 1
        %s612 = scalar_select %p611, %s34, 1
        %s613 = smul.addr %s612, 16
        %s614 = smul.addr %s613, 8
        %s615 = scalar_lea.vmem %s5, %s614
        %p616 = pneg %p192
        %p617 = pneg %p189
        %p618 = scmp.lt.s32.totalorder %s34, 1
        %s619 = scalar_select %p618, %s34, 1
        %s620 = smul.addr %s619, 16
        %s621 = smul.addr %s620, 8
        %s622 = scalar_lea.vmem %s6, %s621
        %p623 = pneg %p218
        %p624 = pneg %p215
        %p625 = scmp.lt.s32.totalorder %s34, 1
        %s626 = scalar_select %p625, %s34, 1
        %s627 = smul.addr %s626, 4
        %s628 = smul.addr %s627, 8
        %s629 = scalar_lea.vmem %s7, %s628
        %p630 = pneg %p244
        %p631 = pneg %p241
        %p632 = scmp.lt.s32.totalorder %s34, 1
        %s633 = scalar_select %p632, %s34, 1
        %s634 = scalar_lea.vmem %s8, %s633
        %p635 = pneg %p270
        %p636 = pneg %p267
        %p637 = scmp.lt.s32.totalorder %s34, 1
        %s638 = scalar_select %p637, %s34, 1
        %s639 = scalar_lea.vmem %s9, %s638
        %p640 = pneg %p296
        %p641 = pneg %p293
        %p642 = scmp.lt.s32.totalorder %s34, 1
        %s643 = scalar_select %p642, %s34, 1
        %s644 = scalar_lea.vmem %s10, %s643
        %p645 = pneg %p322
        %p646 = pneg %p319
        %p647 = scmp.lt.s32.totalorder %s34, 1
        %s648 = scalar_select %p647, %s34, 1
        %s649 = smul.addr %s648, 4
        %s650 = smul.addr %s649, 8
        %s651 = scalar_lea.vmem %s11, %s650
        %p652 = pneg %p348
        %p653 = pneg %p345
        %p654 = scmp.lt.s32.totalorder %s34, 1
        %s655 = scalar_select %p654, %s34, 1
        %s656 = scalar_lea.vmem %s12, %s655
        %p657 = pneg %p374
        %p658 = pneg %p371
        %p659 = scmp.lt.s32.totalorder %s34, 1
        %s660 = scalar_select %p659, %s34, 1
        %s661 = smul.addr %s660, 8
        %s662 = smul.addr %s661, 8
        %s663 = scalar_lea.vmem %s13, %s662
        %p664 = pneg %p400
        %p665 = pneg %p397
        %p666 = scmp.lt.s32.totalorder %s34, 1
        %s667 = scalar_select %p666, %s34, 1
        %s668 = scalar_lea.vmem %s14, %s667
        %p669 = pneg %p426
        %p670 = pneg %p423
        %p671 = pneg %p452
        %p672 = pneg %p449
        %s673 = sand.u32 %s439, 1
        %s674 = scalar_lea.sflag [#allocation4], %s673
        %s675 = sand.u32 %s439, 1
        %s676 = smul.addr %s675, 8
        %s677 = scalar_lea.vmem [#allocation3], %s676
        %p678 = scmp.lt.s32.totalorder %s33, 1
        %s679 = scalar_select %p678, %s33, 1
        %s680 = smul.addr %s679, 8
        %s681 = scalar_lea.vmem %s0, %s680
        %p682 = scmp.lt.s32.totalorder %s33, 1
        %s683 = scalar_select %p682, %s33, 1
        %s684 = smul.addr %s683, 8
        %s685 = scalar_lea.vmem %s1, %s684
        %p686 = scmp.lt.s32.totalorder %s34, 1
        %s687 = scalar_select %p686, %s34, 1
        %s688 = scalar_lea.vmem %s2, %s687
        %p689 = scmp.lt.s32.totalorder %s34, 1
        %s690 = scalar_select %p689, %s34, 1
        %s691 = scalar_lea.vmem %s3, %s690
        %p692 = scmp.lt.s32.totalorder %s34, 1
        %s693 = scalar_select %p692, %s34, 1
        %s694 = smul.addr %s693, 16
        %s695 = smul.addr %s694, 8
        %s696 = scalar_lea.vmem %s4, %s695
        %p697 = scmp.lt.s32.totalorder %s34, 1
        %s698 = scalar_select %p697, %s34, 1
        %s699 = smul.addr %s698, 16
        %s700 = smul.addr %s699, 8
        %s701 = scalar_lea.vmem %s5, %s700
        %p702 = scmp.lt.s32.totalorder %s34, 1
        %s703 = scalar_select %p702, %s34, 1
        %s704 = smul.addr %s703, 16
        %s705 = smul.addr %s704, 8
        %s706 = scalar_lea.vmem %s6, %s705
        %p707 = scmp.lt.s32.totalorder %s34, 1
        %s708 = scalar_select %p707, %s34, 1
        %s709 = smul.addr %s708, 4
        %s710 = smul.addr %s709, 8
        %s711 = scalar_lea.vmem %s7, %s710
        %p712 = scmp.lt.s32.totalorder %s34, 1
        %s713 = scalar_select %p712, %s34, 1
        %s714 = scalar_lea.vmem %s8, %s713
        %p715 = scmp.lt.s32.totalorder %s34, 1
        %s716 = scalar_select %p715, %s34, 1
        %s717 = scalar_lea.vmem %s9, %s716
        %p718 = scmp.lt.s32.totalorder %s34, 1
        %s719 = scalar_select %p718, %s34, 1
        %s720 = scalar_lea.vmem %s10, %s719
        %p721 = scmp.lt.s32.totalorder %s34, 1
        %s722 = scalar_select %p721, %s34, 1
        %s723 = smul.addr %s722, 4
        %s724 = smul.addr %s723, 8
        %s725 = scalar_lea.vmem %s11, %s724
        %p726 = scmp.lt.s32.totalorder %s34, 1
        %s727 = scalar_select %p726, %s34, 1
        %s728 = scalar_lea.vmem %s12, %s727
        %p729 = scmp.lt.s32.totalorder %s34, 1
        %s730 = scalar_select %p729, %s34, 1
        %s731 = smul.addr %s730, 8
        %s732 = smul.addr %s731, 8
        %s733 = scalar_lea.vmem %s13, %s732
        %p734 = scmp.lt.s32.totalorder %s34, 1
        %s735 = scalar_select %p734, %s34, 1
        %s736 = scalar_lea.vmem %s14, %s735
        %p737 = scmp.eq.s32.totalorder %s34, 0
        // Predicated region
        $region81: #{tpu_custom_call.1} parent=79 // pred_check
          %p738 = pneg %p737
        $region82: #{tpu_custom_call.1} parent=79 // pred_check_branch
          %740 = sbr.rel (%p738) target = $region84
        $region83: #{tpu_custom_call.1} parent=79 // pred_region
          %v741 = vld [vmem:[%s681] sm:$0xff]
          %vm742 = vcmask 261120
          %743 = vst.msk [vmem:[#allocation2] sm:$0xff] %vm742, %v741
        $region84: #{tpu_custom_call.1} parent=79 // pred_fallthru
          _
        %v744 = vld [vmem:[#allocation2] sm:$0xff]
        %v745 = vld [vmem:[%s685] sm:$0xff]
        %v746 = vld [vmem:[%s688] sm:$0x1]
        %v747 = vld [vmem:[%s691] sm:$0x1]
        %vm748 = vcmask 261120
        %v749 = vsel %vm748, %v744, 0.0
        %750 = vadd.xlane.f32.xlu0 %v749
        %v751 = vpop.xlane.xlu0 %750
        %v752 = vrcp.pop 32.0
        %v753 = vmul.f32 32.0, %v752
        %v754 = vsub.f32 1.0, %v753
        %v755 = vmul.f32 %v752, %v754
        %v756 = vadd.f32 %v752, %v755
        %vm757 = vweird.f32 %v752
        %v758 = vsel %vm757, %v752, %v756
        %v759 = vmul.f32 %v751, %v758
        %v760 = vsub.f32 %v744, %v759
        %v761 = vmul.f32 %v760, %v760
        %v762 = vsel %vm748, %v761, 0.0
        %763 = vadd.xlane.f32.xlu0 %v762
        %v764 = vpop.xlane.xlu0 %763
        %v765 = vmul.f32 %v764, %v758
        %v766 = vadd.f32 %v765, 1e-05
        %v767 = vrsqrt.pop %v766
        %v768 = vmul.f32 %v767, %v766
        %v769 = vmul.f32 %v768, %v767
        %v770 = vmul.f32 0.5, %v769
        %v771 = vsub.f32 1.5, %v770
        %v772 = vmul.f32 %v767, %v771
        %v773 = vmul.f32 %v766, %v772
        %vm774 = vcmp.eq.f32.partialorder %v766, inf
        %v775 = vsel %vm774, %v766, %v773
        %vm776 = vcmp.eq.f32.partialorder %v766, 0.0
        %v777 = vand.u32 %v766, 2147483648
        %v778 = vsel %vm776, %v777, %v775
        %v779 = vrcp.pop %v778
        %v780 = vmul.f32 %v778, %v779
        %v781 = vsub.f32 1.0, %v780
        %v782 = vmul.f32 %v779, %v781
        %v783 = vadd.f32 %v779, %v782
        %vm784 = vweird.f32 %v778
        %vm785 = vweird.f32 %v779
        %vm786 = vmor %vm784, %vm785
        %v787 = vsel %vm786, %v779, %v783
        %v788 = vand.u32 2147483647, %v778
        %vm789 = vcmp.eq.f32.partialorder %v788, 8.507059e+37
        %v790 = vand.u32 %v778, 2147483648
        %v791 = vor.u32 1.1754944e-38, %v790
        %v792 = vsel %vm789, %v791, %v787
        %v793 = vmul.f32 %v760, %v792
        %v795 = vperm.slane %v746, 0
        %v797 = vmul.f32 %v793, %v795
        %v799 = vperm.slane %v747, 0
        %v801 = vadd.f32 %v797, %v799
        %v802 = vsel %vm748, %v745, 0.0
        %803 = vadd.xlane.f32.xlu0 %v802
        %v804 = vpop.xlane.xlu0 %803
        %v805 = vmul.f32 %v804, %v758
        %v806 = vsub.f32 %v745, %v805
        %v807 = vmul.f32 %v806, %v806
        %v808 = vsel %vm748, %v807, 0.0
        %809 = vadd.xlane.f32.xlu0 %v808
        %v810 = vpop.xlane.xlu0 %809
        %v811 = vmul.f32 %v810, %v758
        %v812 = vadd.f32 %v811, 1e-05
        %v813 = vrsqrt.pop %v812
        %v814 = vmul.f32 %v813, %v812
        %v815 = vmul.f32 %v814, %v813
        %v816 = vmul.f32 0.5, %v815
        %v817 = vsub.f32 1.5, %v816
        %v818 = vmul.f32 %v813, %v817
        %v819 = vmul.f32 %v812, %v818
        %vm820 = vcmp.eq.f32.partialorder %v812, inf
        %v821 = vsel %vm820, %v812, %v819
        %vm822 = vcmp.eq.f32.partialorder %v812, 0.0
        %v823 = vand.u32 %v812, 2147483648
        %v824 = vsel %vm822, %v823, %v821
        %v825 = vrcp.pop %v824
        %v826 = vmul.f32 %v824, %v825
        %v827 = vsub.f32 1.0, %v826
        %v828 = vmul.f32 %v825, %v827
        %v829 = vadd.f32 %v825, %v828
        %vm830 = vweird.f32 %v824
        %vm831 = vweird.f32 %v825
        %vm832 = vmor %vm830, %vm831
        %v833 = vsel %vm832, %v825, %v829
        %v834 = vand.u32 2147483647, %v824
        %vm835 = vcmp.eq.f32.partialorder %v834, 8.507059e+37
        %v836 = vand.u32 %v824, 2147483648
        %v837 = vor.u32 1.1754944e-38, %v836
        %v838 = vsel %vm835, %v837, %v833
        %v839 = vmul.f32 %v806, %v838
        %v840 = vmul.f32 %v839, %v795
        %v841 = vadd.f32 %v840, %v799
        %v842 = vld [vmem:[%s696] sm:$0xff]
        %v843 = vld [vmem:[%s696 + $0x8] sm:$0xff]
        %v844 = vld [vmem:[%s696 + $0x10] sm:$0xff]
        %v845 = vld [vmem:[%s696 + $0x18] sm:$0xff]
        %v846 = vld [vmem:[%s696 + $0x20] sm:$0xff]
        %v847 = vld [vmem:[%s696 + $0x28] sm:$0xff]
        %v848 = vld [vmem:[%s696 + $0x30] sm:$0xff]
        %v849 = vld [vmem:[%s696 + $0x38] sm:$0xff]
        %v850 = vld [vmem:[%s696 + $0x40] sm:$0xff]
        %v851 = vld [vmem:[%s696 + $0x48] sm:$0xff]
        %v852 = vld [vmem:[%s696 + $0x50] sm:$0xff]
        %v853 = vld [vmem:[%s696 + $0x58] sm:$0xff]
        %v854 = vld [vmem:[%s696 + $0x60] sm:$0xff]
        %v855 = vld [vmem:[%s696 + $0x68] sm:$0xff]
        %v856 = vld [vmem:[%s696 + $0x70] sm:$0xff]
        %v857 = vld [vmem:[%s696 + $0x78] sm:$0xff]
        %v858 = vld [vmem:[%s701] sm:$0xff]
        %v859 = vld [vmem:[%s701 + $0x8] sm:$0xff]
        %v860 = vld [vmem:[%s701 + $0x10] sm:$0xff]
        %v861 = vld [vmem:[%s701 + $0x18] sm:$0xff]
        %v862 = vld [vmem:[%s701 + $0x20] sm:$0xff]
        %v863 = vld [vmem:[%s701 + $0x28] sm:$0xff]
        %v864 = vld [vmem:[%s701 + $0x30] sm:$0xff]
        %v865 = vld [vmem:[%s701 + $0x38] sm:$0xff]
        %v866 = vld [vmem:[%s701 + $0x40] sm:$0xff]
        %v867 = vld [vmem:[%s701 + $0x48] sm:$0xff]
        %v868 = vld [vmem:[%s701 + $0x50] sm:$0xff]
        %v869 = vld [vmem:[%s701 + $0x58] sm:$0xff]
        %v870 = vld [vmem:[%s701 + $0x60] sm:$0xff]
        %v871 = vld [vmem:[%s701 + $0x68] sm:$0xff]
        %v872 = vld [vmem:[%s701 + $0x70] sm:$0xff]
        %v873 = vld [vmem:[%s701 + $0x78] sm:$0xff]
        %v874 = vld [vmem:[%s706] sm:$0xff]
        %v875 = vld [vmem:[%s706 + $0x8] sm:$0xff]
        %v876 = vld [vmem:[%s706 + $0x10] sm:$0xff]
        %v877 = vld [vmem:[%s706 + $0x18] sm:$0xff]
        %v878 = vld [vmem:[%s706 + $0x20] sm:$0xff]
        %v879 = vld [vmem:[%s706 + $0x28] sm:$0xff]
        %v880 = vld [vmem:[%s706 + $0x30] sm:$0xff]
        %v881 = vld [vmem:[%s706 + $0x38] sm:$0xff]
        %v882 = vld [vmem:[%s706 + $0x40] sm:$0xff]
        %v883 = vld [vmem:[%s706 + $0x48] sm:$0xff]
        %v884 = vld [vmem:[%s706 + $0x50] sm:$0xff]
        %v885 = vld [vmem:[%s706 + $0x58] sm:$0xff]
        %v886 = vld [vmem:[%s706 + $0x60] sm:$0xff]
        %v887 = vld [vmem:[%s706 + $0x68] sm:$0xff]
        %v888 = vld [vmem:[%s706 + $0x70] sm:$0xff]
        %v889 = vld [vmem:[%s706 + $0x78] sm:$0xff]
        %v890 = vld [vmem:[%s711] sm:$0xff]
        %v891 = vld [vmem:[%s711 + $0x8] sm:$0xff]
        %v892 = vld [vmem:[%s711 + $0x10] sm:$0xff]
        %v893 = vld [vmem:[%s711 + $0x18] sm:$0xff]
        %v895 = vsel %vm748, %v801, 0
        %897 = vmatpush.msra.mxu0 0.0
        %898 = vmatpush.msra.mxu0 0.0
        %899 = vmatpush.msra.mxu0 0.0
        %900 = vmatpush.msra.mxu0 0.0
        %901 = vmatpush.msra.mxu0 0.0
        %902 = vmatpush.msra.mxu0 0.0
        %903 = vmatpush.msra.mxu0 0.0
        %904 = vmatpush.msra.mxu0 0.0
        %905 = vmatpush.msra.mxu0 0.0
        %906 = vmatpush.msra.mxu0 0.0
        %907 = vmatpush.msra.mxu0 0.0
        %908 = vmatpush.msra.mxu0 0.0
        %909 = vmatpush.msra.mxu0 %v845
        %910 = vmatpush.msra.mxu0 %v844
        %911 = vmatpush.msra.mxu0 %v843
        %912 = vmatpush.msra.mxu0 %v842
        %913 = vmatmul.f32.gmra.mxu0 %v895
        %v914 = vpop.f32.mrf.mxu0
        %v915 = vadd.f32 0.0, %v914
        %916 = vdwg.mxu0
        %917 = vmatpush.msra.mxu0 0.0
        %918 = vmatpush.msra.mxu0 0.0
        %919 = vmatpush.msra.mxu0 0.0
        %920 = vmatpush.msra.mxu0 0.0
        %921 = vmatpush.msra.mxu0 0.0
        %922 = vmatpush.msra.mxu0 0.0
        %923 = vmatpush.msra.mxu0 0.0
        %924 = vmatpush.msra.mxu0 0.0
        %925 = vmatpush.msra.mxu0 0.0
        %926 = vmatpush.msra.mxu0 0.0
        %927 = vmatpush.msra.mxu0 0.0
        %928 = vmatpush.msra.mxu0 0.0
        %929 = vmatpush.msra.mxu0 %v849
        %930 = vmatpush.msra.mxu0 %v848
        %931 = vmatpush.msra.mxu0 %v847
        %932 = vmatpush.msra.mxu0 %v846
        %933 = vmatmul.f32.gmra.mxu0 %v895
        %v934 = vpop.f32.mrf.mxu0
        %v935 = vadd.f32 0.0, %v934
        %936 = vdwg.mxu0
        %937 = vmatpush.msra.mxu0 0.0
        %938 = vmatpush.msra.mxu0 0.0
        %939 = vmatpush.msra.mxu0 0.0
        %940 = vmatpush.msra.mxu0 0.0
        %941 = vmatpush.msra.mxu0 0.0
        %942 = vmatpush.msra.mxu0 0.0
        %943 = vmatpush.msra.mxu0 0.0
        %944 = vmatpush.msra.mxu0 0.0
        %945 = vmatpush.msra.mxu0 0.0
        %946 = vmatpush.msra.mxu0 0.0
        %947 = vmatpush.msra.mxu0 0.0
        %948 = vmatpush.msra.mxu0 0.0
        %949 = vmatpush.msra.mxu0 %v853
        %950 = vmatpush.msra.mxu0 %v852
        %951 = vmatpush.msra.mxu0 %v851
        %952 = vmatpush.msra.mxu0 %v850
        %953 = vmatmul.f32.gmra.mxu0 %v895
        %v954 = vpop.f32.mrf.mxu0
        %v955 = vadd.f32 0.0, %v954
        %956 = vdwg.mxu0
        %957 = vmatpush.msra.mxu0 0.0
        %958 = vmatpush.msra.mxu0 0.0
        %959 = vmatpush.msra.mxu0 0.0
        %960 = vmatpush.msra.mxu0 0.0
        %961 = vmatpush.msra.mxu0 0.0
        %962 = vmatpush.msra.mxu0 0.0
        %963 = vmatpush.msra.mxu0 0.0
        %964 = vmatpush.msra.mxu0 0.0
        %965 = vmatpush.msra.mxu0 0.0
        %966 = vmatpush.msra.mxu0 0.0
        %967 = vmatpush.msra.mxu0 0.0
        %968 = vmatpush.msra.mxu0 0.0
        %969 = vmatpush.msra.mxu0 %v857
        %970 = vmatpush.msra.mxu0 %v856
        %971 = vmatpush.msra.mxu0 %v855
        %972 = vmatpush.msra.mxu0 %v854
        %973 = vmatmul.f32.gmra.mxu0 %v895
        %v974 = vpop.f32.mrf.mxu0
        %v975 = vadd.f32 0.0, %v974
        %976 = vdwg.mxu0
        %v978 = vsel %vm748, %v841, 0
        %980 = vmatpush.msra.mxu0 0.0
        %981 = vmatpush.msra.mxu0 0.0
        %982 = vmatpush.msra.mxu0 0.0
        %983 = vmatpush.msra.mxu0 0.0
        %984 = vmatpush.msra.mxu0 0.0
        %985 = vmatpush.msra.mxu0 0.0
        %986 = vmatpush.msra.mxu0 0.0
        %987 = vmatpush.msra.mxu0 0.0
        %988 = vmatpush.msra.mxu0 0.0
        %989 = vmatpush.msra.mxu0 0.0
        %990 = vmatpush.msra.mxu0 0.0
        %991 = vmatpush.msra.mxu0 0.0
        %992 = vmatpush.msra.mxu0 %v861
        %993 = vmatpush.msra.mxu0 %v860
        %994 = vmatpush.msra.mxu0 %v859
        %995 = vmatpush.msra.mxu0 %v858
        %996 = vmatmul.f32.gmra.mxu0 %v978
        %v997 = vpop.f32.mrf.mxu0
        %v998 = vadd.f32 0.0, %v997
        %999 = vdwg.mxu0
        %1000 = vmatpush.msra.mxu0 0.0
        %1001 = vmatpush.msra.mxu0 0.0
        %1002 = vmatpush.msra.mxu0 0.0
        %1003 = vmatpush.msra.mxu0 0.0
        %1004 = vmatpush.msra.mxu0 0.0
        %1005 = vmatpush.msra.mxu0 0.0
        %1006 = vmatpush.msra.mxu0 0.0
        %1007 = vmatpush.msra.mxu0 0.0
        %1008 = vmatpush.msra.mxu0 0.0
        %1009 = vmatpush.msra.mxu0 0.0
        %1010 = vmatpush.msra.mxu0 0.0
        %1011 = vmatpush.msra.mxu0 0.0
        %1012 = vmatpush.msra.mxu0 %v865
        %1013 = vmatpush.msra.mxu0 %v864
        %1014 = vmatpush.msra.mxu0 %v863
        %1015 = vmatpush.msra.mxu0 %v862
        %1016 = vmatmul.f32.gmra.mxu0 %v978
        %v1017 = vpop.f32.mrf.mxu0
        %v1018 = vadd.f32 0.0, %v1017
        %1019 = vdwg.mxu0
        %1020 = vmatpush.msra.mxu0 0.0
        %1021 = vmatpush.msra.mxu0 0.0
        %1022 = vmatpush.msra.mxu0 0.0
        %1023 = vmatpush.msra.mxu0 0.0
        %1024 = vmatpush.msra.mxu0 0.0
        %1025 = vmatpush.msra.mxu0 0.0
        %1026 = vmatpush.msra.mxu0 0.0
        %1027 = vmatpush.msra.mxu0 0.0
        %1028 = vmatpush.msra.mxu0 0.0
        %1029 = vmatpush.msra.mxu0 0.0
        %1030 = vmatpush.msra.mxu0 0.0
        %1031 = vmatpush.msra.mxu0 0.0
        %1032 = vmatpush.msra.mxu0 %v869
        %1033 = vmatpush.msra.mxu0 %v868
        %1034 = vmatpush.msra.mxu0 %v867
        %1035 = vmatpush.msra.mxu0 %v866
        %1036 = vmatmul.f32.gmra.mxu0 %v978
        %v1037 = vpop.f32.mrf.mxu0
        %v1038 = vadd.f32 0.0, %v1037
        %1039 = vdwg.mxu0
        %1040 = vmatpush.msra.mxu0 0.0
        %1041 = vmatpush.msra.mxu0 0.0
        %1042 = vmatpush.msra.mxu0 0.0
        %1043 = vmatpush.msra.mxu0 0.0
        %1044 = vmatpush.msra.mxu0 0.0
        %1045 = vmatpush.msra.mxu0 0.0
        %1046 = vmatpush.msra.mxu0 0.0
        %1047 = vmatpush.msra.mxu0 0.0
        %1048 = vmatpush.msra.mxu0 0.0
        %1049 = vmatpush.msra.mxu0 0.0
        %1050 = vmatpush.msra.mxu0 0.0
        %1051 = vmatpush.msra.mxu0 0.0
        %1052 = vmatpush.msra.mxu0 %v873
        %1053 = vmatpush.msra.mxu0 %v872
        %1054 = vmatpush.msra.mxu0 %v871
        %1055 = vmatpush.msra.mxu0 %v870
        %1056 = vmatmul.f32.gmra.mxu0 %v978
        %v1057 = vpop.f32.mrf.mxu0
        %v1058 = vadd.f32 0.0, %v1057
        %1059 = vdwg.mxu0
        %1060 = vmatpush.msra.mxu0 0.0
        %1061 = vmatpush.msra.mxu0 0.0
        %1062 = vmatpush.msra.mxu0 0.0
        %1063 = vmatpush.msra.mxu0 0.0
        %1064 = vmatpush.msra.mxu0 0.0
        %1065 = vmatpush.msra.mxu0 0.0
        %1066 = vmatpush.msra.mxu0 0.0
        %1067 = vmatpush.msra.mxu0 0.0
        %1068 = vmatpush.msra.mxu0 0.0
        %1069 = vmatpush.msra.mxu0 0.0
        %1070 = vmatpush.msra.mxu0 0.0
        %1071 = vmatpush.msra.mxu0 0.0
        %1072 = vmatpush.msra.mxu0 %v877
        %1073 = vmatpush.msra.mxu0 %v876
        %1074 = vmatpush.msra.mxu0 %v875
        %1075 = vmatpush.msra.mxu0 %v874
        %1076 = vmatmul.f32.gmra.mxu0 %v978
        %v1077 = vpop.f32.mrf.mxu0
        %v1078 = vadd.f32 0.0, %v1077
        %1079 = vdwg.mxu0
        %1080 = vmatpush.msra.mxu0 0.0
        %1081 = vmatpush.msra.mxu0 0.0
        %1082 = vmatpush.msra.mxu0 0.0
        %1083 = vmatpush.msra.mxu0 0.0
        %1084 = vmatpush.msra.mxu0 0.0
        %1085 = vmatpush.msra.mxu0 0.0
        %1086 = vmatpush.msra.mxu0 0.0
        %1087 = vmatpush.msra.mxu0 0.0
        %1088 = vmatpush.msra.mxu0 0.0
        %1089 = vmatpush.msra.mxu0 0.0
        %1090 = vmatpush.msra.mxu0 0.0
        %1091 = vmatpush.msra.mxu0 0.0
        %1092 = vmatpush.msra.mxu0 %v881
        %1093 = vmatpush.msra.mxu0 %v880
        %1094 = vmatpush.msra.mxu0 %v879
        %1095 = vmatpush.msra.mxu0 %v878
        %1096 = vmatmul.f32.gmra.mxu0 %v978
        %v1097 = vpop.f32.mrf.mxu0
        %v1098 = vadd.f32 0.0, %v1097
        %1099 = vdwg.mxu0
        %1100 = vmatpush.msra.mxu0 0.0
        %1101 = vmatpush.msra.mxu0 0.0
        %1102 = vmatpush.msra.mxu0 0.0
        %1103 = vmatpush.msra.mxu0 0.0
        %1104 = vmatpush.msra.mxu0 0.0
        %1105 = vmatpush.msra.mxu0 0.0
        %1106 = vmatpush.msra.mxu0 0.0
        %1107 = vmatpush.msra.mxu0 0.0
        %1108 = vmatpush.msra.mxu0 0.0
        %1109 = vmatpush.msra.mxu0 0.0
        %1110 = vmatpush.msra.mxu0 0.0
        %1111 = vmatpush.msra.mxu0 0.0
        %1112 = vmatpush.msra.mxu0 %v885
        %1113 = vmatpush.msra.mxu0 %v884
        %1114 = vmatpush.msra.mxu0 %v883
        %1115 = vmatpush.msra.mxu0 %v882
        %1116 = vmatmul.f32.gmra.mxu0 %v978
        %v1117 = vpop.f32.mrf.mxu0
        %v1118 = vadd.f32 0.0, %v1117
        %1119 = vdwg.mxu0
        %1120 = vmatpush.msra.mxu0 0.0
        %1121 = vmatpush.msra.mxu0 0.0
        %1122 = vmatpush.msra.mxu0 0.0
        %1123 = vmatpush.msra.mxu0 0.0
        %1124 = vmatpush.msra.mxu0 0.0
        %1125 = vmatpush.msra.mxu0 0.0
        %1126 = vmatpush.msra.mxu0 0.0
        %1127 = vmatpush.msra.mxu0 0.0
        %1128 = vmatpush.msra.mxu0 0.0
        %1129 = vmatpush.msra.mxu0 0.0
        %1130 = vmatpush.msra.mxu0 0.0
        %1131 = vmatpush.msra.mxu0 0.0
        %1132 = vmatpush.msra.mxu0 %v889
        %1133 = vmatpush.msra.mxu0 %v888
        %1134 = vmatpush.msra.mxu0 %v887
        %1135 = vmatpush.msra.mxu0 %v886
        %1136 = vmatmul.f32.gmra.mxu0 %v978
        %v1137 = vpop.f32.mrf.mxu0
        %v1138 = vadd.f32 0.0, %v1137
        %1139 = vdwg.mxu0
        %vm1140 = vcmask 64512
        %v1142 = vsel %vm1140, %v915, 0
        %v1145 = vsel %vm1140, %v998, 0
        %1147 = vmatpush.xpose.msra.mxu0 0.0
        %1148 = vmatpush.xpose.msra.mxu0 0.0
        %1149 = vmatpush.xpose.msra.mxu0 0.0
        %1150 = vmatpush.xpose.msra.mxu0 0.0
        %1151 = vmatpush.xpose.msra.mxu0 0.0
        %1152 = vmatpush.xpose.msra.mxu0 0.0
        %1153 = vmatpush.xpose.msra.mxu0 0.0
        %1154 = vmatpush.xpose.msra.mxu0 0.0
        %1155 = vmatpush.xpose.msra.mxu0 0.0
        %1156 = vmatpush.xpose.msra.mxu0 0.0
        %1157 = vmatpush.xpose.msra.mxu0 0.0
        %1158 = vmatpush.xpose.msra.mxu0 0.0
        %1159 = vmatpush.xpose.msra.mxu0 0.0
        %1160 = vmatpush.xpose.msra.mxu0 0.0
        %1161 = vmatpush.xpose.msra.mxu0 0.0
        %1162 = vmatpush.xpose.msra.mxu0 %v1145
        %1163 = vmatmul.f32.gmra.mxu0 %v1142
        %v1164 = vpop.f32.mrf.mxu0
        %v1165 = vadd.f32 0.0, %v1164
        %1166 = vdwg.mxu0
        %v1168 = vsel %vm1140, %v935, 0
        %v1171 = vsel %vm1140, %v1018, 0
        %1173 = vmatpush.xpose.msra.mxu0 0.0
        %1174 = vmatpush.xpose.msra.mxu0 0.0
        %1175 = vmatpush.xpose.msra.mxu0 0.0
        %1176 = vmatpush.xpose.msra.mxu0 0.0
        %1177 = vmatpush.xpose.msra.mxu0 0.0
        %1178 = vmatpush.xpose.msra.mxu0 0.0
        %1179 = vmatpush.xpose.msra.mxu0 0.0
        %1180 = vmatpush.xpose.msra.mxu0 0.0
        %1181 = vmatpush.xpose.msra.mxu0 0.0
        %1182 = vmatpush.xpose.msra.mxu0 0.0
        %1183 = vmatpush.xpose.msra.mxu0 0.0
        %1184 = vmatpush.xpose.msra.mxu0 0.0
        %1185 = vmatpush.xpose.msra.mxu0 0.0
        %1186 = vmatpush.xpose.msra.mxu0 0.0
        %1187 = vmatpush.xpose.msra.mxu0 0.0
        %1188 = vmatpush.xpose.msra.mxu0 %v1171
        %1189 = vmatmul.f32.gmra.mxu0 %v1168
        %v1190 = vpop.f32.mrf.mxu0
        %v1191 = vadd.f32 0.0, %v1190
        %1192 = vdwg.mxu0
        %v1194 = vsel %vm1140, %v955, 0
        %v1197 = vsel %vm1140, %v1038, 0
        %1199 = vmatpush.xpose.msra.mxu0 0.0
        %1200 = vmatpush.xpose.msra.mxu0 0.0
        %1201 = vmatpush.xpose.msra.mxu0 0.0
        %1202 = vmatpush.xpose.msra.mxu0 0.0
        %1203 = vmatpush.xpose.msra.mxu0 0.0
        %1204 = vmatpush.xpose.msra.mxu0 0.0
        %1205 = vmatpush.xpose.msra.mxu0 0.0
        %1206 = vmatpush.xpose.msra.mxu0 0.0
        %1207 = vmatpush.xpose.msra.mxu0 0.0
        %1208 = vmatpush.xpose.msra.mxu0 0.0
        %1209 = vmatpush.xpose.msra.mxu0 0.0
        %1210 = vmatpush.xpose.msra.mxu0 0.0
        %1211 = vmatpush.xpose.msra.mxu0 0.0
        %1212 = vmatpush.xpose.msra.mxu0 0.0
        %1213 = vmatpush.xpose.msra.mxu0 0.0
        %1214 = vmatpush.xpose.msra.mxu0 %v1197
        %1215 = vmatmul.f32.gmra.mxu0 %v1194
        %v1216 = vpop.f32.mrf.mxu0
        %v1217 = vadd.f32 0.0, %v1216
        %1218 = vdwg.mxu0
        %v1220 = vsel %vm1140, %v975, 0
        %v1223 = vsel %vm1140, %v1058, 0
        %1225 = vmatpush.xpose.msra.mxu0 0.0
        %1226 = vmatpush.xpose.msra.mxu0 0.0
        %1227 = vmatpush.xpose.msra.mxu0 0.0
        %1228 = vmatpush.xpose.msra.mxu0 0.0
        %1229 = vmatpush.xpose.msra.mxu0 0.0
        %1230 = vmatpush.xpose.msra.mxu0 0.0
        %1231 = vmatpush.xpose.msra.mxu0 0.0
        %1232 = vmatpush.xpose.msra.mxu0 0.0
        %1233 = vmatpush.xpose.msra.mxu0 0.0
        %1234 = vmatpush.xpose.msra.mxu0 0.0
        %1235 = vmatpush.xpose.msra.mxu0 0.0
        %1236 = vmatpush.xpose.msra.mxu0 0.0
        %1237 = vmatpush.xpose.msra.mxu0 0.0
        %1238 = vmatpush.xpose.msra.mxu0 0.0
        %1239 = vmatpush.xpose.msra.mxu0 0.0
        %1240 = vmatpush.xpose.msra.mxu0 %v1223
        %1241 = vmatmul.f32.gmra.mxu0 %v1220
        %v1242 = vpop.f32.mrf.mxu0
        %v1243 = vadd.f32 0.0, %v1242
        %1244 = vdwg.mxu0
        %v1245 = vsel %vm1140, %v1165, -inf
        %1246 = vmax.xlane.f32.xlu0 %v1245
        %v1247 = vpop.xlane.xlu0 %1246
        %v1248 = vsel %vm1140, %v1191, -inf
        %1249 = vmax.xlane.f32.xlu0 %v1248
        %v1250 = vpop.xlane.xlu0 %1249
        %v1251 = vsel %vm1140, %v1217, -inf
        %1252 = vmax.xlane.f32.xlu0 %v1251
        %v1253 = vpop.xlane.xlu0 %1252
        %v1254 = vsel %vm1140, %v1243, -inf
        %1255 = vmax.xlane.f32.xlu0 %v1254
        %v1256 = vpop.xlane.xlu0 %1255
        %v1257 = vsub.f32 %v1165, %v1247
        %v1258 = vsub.f32 %v1191, %v1250
        %v1259 = vsub.f32 %v1217, %v1253
        %v1260 = vsub.f32 %v1243, %v1256
        %v1261 = vmul.f32 %v1257, 1.442695
        %v1262 = vpow.pop %v1261
        %v1263 = vmul.f32 %v1258, 1.442695
        %v1264 = vpow.pop %v1263
        %v1265 = vmul.f32 %v1259, 1.442695
        %v1266 = vpow.pop %v1265
        %v1267 = vmul.f32 %v1260, 1.442695
        %v1268 = vpow.pop %v1267
        %v1269 = vsel %vm1140, %v1262, 0.0
        %1270 = vadd.xlane.f32.xlu0 %v1269
        %v1271 = vpop.xlane.xlu0 %1270
        %v1272 = vsel %vm1140, %v1264, 0.0
        %1273 = vadd.xlane.f32.xlu0 %v1272
        %v1274 = vpop.xlane.xlu0 %1273
        %v1275 = vsel %vm1140, %v1266, 0.0
        %1276 = vadd.xlane.f32.xlu0 %v1275
        %v1277 = vpop.xlane.xlu0 %1276
        %v1278 = vsel %vm1140, %v1268, 0.0
        %1279 = vadd.xlane.f32.xlu0 %v1278
        %v1280 = vpop.xlane.xlu0 %1279
        %v1281 = vrcp.pop %v1271
        %v1282 = vrcp.pop %v1274
        %v1283 = vrcp.pop %v1277
        %v1284 = vrcp.pop %v1280
        %v1285 = vmul.f32 %v1262, %v1281
        %v1286 = vmul.f32 %v1264, %v1282
        %v1287 = vmul.f32 %v1266, %v1283
        %v1288 = vmul.f32 %v1268, %v1284
        %v1290 = vsel %vm1140, %v1285, 0
        %1292 = vmatpush.msra.mxu0 0.0
        %1293 = vmatpush.msra.mxu0 0.0
        %1294 = vmatpush.msra.mxu0 0.0
        %1295 = vmatpush.msra.mxu0 0.0
        %1296 = vmatpush.msra.mxu0 0.0
        %1297 = vmatpush.msra.mxu0 0.0
        %1298 = vmatpush.msra.mxu0 0.0
        %1299 = vmatpush.msra.mxu0 0.0
        %1300 = vmatpush.msra.mxu0 0.0
        %1301 = vmatpush.msra.mxu0 0.0
        %1302 = vmatpush.msra.mxu0 0.0
        %1303 = vmatpush.msra.mxu0 0.0
        %1304 = vmatpush.msra.mxu0 0.0
        %1305 = vmatpush.msra.mxu0 0.0
        %1306 = vmatpush.msra.mxu0 0.0
        %1307 = vmatpush.msra.mxu0 %v1078
        %1308 = vmatmul.f32.gmra.mxu0 %v1290
        %v1309 = vpop.f32.mrf.mxu0
        %v1310 = vadd.f32 0.0, %v1309
        %1311 = vdwg.mxu0
        %v1313 = vsel %vm1140, %v1286, 0
        %1315 = vmatpush.msra.mxu0 0.0
        %1316 = vmatpush.msra.mxu0 0.0
        %1317 = vmatpush.msra.mxu0 0.0
        %1318 = vmatpush.msra.mxu0 0.0
        %1319 = vmatpush.msra.mxu0 0.0
        %1320 = vmatpush.msra.mxu0 0.0
        %1321 = vmatpush.msra.mxu0 0.0
        %1322 = vmatpush.msra.mxu0 0.0
        %1323 = vmatpush.msra.mxu0 0.0
        %1324 = vmatpush.msra.mxu0 0.0
        %1325 = vmatpush.msra.mxu0 0.0
        %1326 = vmatpush.msra.mxu0 0.0
        %1327 = vmatpush.msra.mxu0 0.0
        %1328 = vmatpush.msra.mxu0 0.0
        %1329 = vmatpush.msra.mxu0 0.0
        %1330 = vmatpush.msra.mxu0 %v1098
        %1331 = vmatmul.f32.gmra.mxu0 %v1313
        %v1332 = vpop.f32.mrf.mxu0
        %v1333 = vadd.f32 0.0, %v1332
        %1334 = vdwg.mxu0
        %v1336 = vsel %vm1140, %v1287, 0
        %1338 = vmatpush.msra.mxu0 0.0
        %1339 = vmatpush.msra.mxu0 0.0
        %1340 = vmatpush.msra.mxu0 0.0
        %1341 = vmatpush.msra.mxu0 0.0
        %1342 = vmatpush.msra.mxu0 0.0
        %1343 = vmatpush.msra.mxu0 0.0
        %1344 = vmatpush.msra.mxu0 0.0
        %1345 = vmatpush.msra.mxu0 0.0
        %1346 = vmatpush.msra.mxu0 0.0
        %1347 = vmatpush.msra.mxu0 0.0
        %1348 = vmatpush.msra.mxu0 0.0
        %1349 = vmatpush.msra.mxu0 0.0
        %1350 = vmatpush.msra.mxu0 0.0
        %1351 = vmatpush.msra.mxu0 0.0
        %1352 = vmatpush.msra.mxu0 0.0
        %1353 = vmatpush.msra.mxu0 %v1118
        %1354 = vmatmul.f32.gmra.mxu0 %v1336
        %v1355 = vpop.f32.mrf.mxu0
        %v1356 = vadd.f32 0.0, %v1355
        %1357 = vdwg.mxu0
        %v1359 = vsel %vm1140, %v1288, 0
        %1361 = vmatpush.msra.mxu0 0.0
        %1362 = vmatpush.msra.mxu0 0.0
        %1363 = vmatpush.msra.mxu0 0.0
        %1364 = vmatpush.msra.mxu0 0.0
        %1365 = vmatpush.msra.mxu0 0.0
        %1366 = vmatpush.msra.mxu0 0.0
        %1367 = vmatpush.msra.mxu0 0.0
        %1368 = vmatpush.msra.mxu0 0.0
        %1369 = vmatpush.msra.mxu0 0.0
        %1370 = vmatpush.msra.mxu0 0.0
        %1371 = vmatpush.msra.mxu0 0.0
        %1372 = vmatpush.msra.mxu0 0.0
        %1373 = vmatpush.msra.mxu0 0.0
        %1374 = vmatpush.msra.mxu0 0.0
        %1375 = vmatpush.msra.mxu0 0.0
        %1376 = vmatpush.msra.mxu0 %v1138
        %1377 = vmatmul.f32.gmra.mxu0 %v1359
        %v1378 = vpop.f32.mrf.mxu0
        %v1379 = vadd.f32 0.0, %v1378
        %1380 = vdwg.mxu0
        %v1382 = vsel %vm1140, %v1310, 0
        %1384 = vmatpush.msra.mxu0 0.0
        %1385 = vmatpush.msra.mxu0 0.0
        %1386 = vmatpush.msra.mxu0 0.0
        %1387 = vmatpush.msra.mxu0 0.0
        %1388 = vmatpush.msra.mxu0 0.0
        %1389 = vmatpush.msra.mxu0 0.0
        %1390 = vmatpush.msra.mxu0 0.0
        %1391 = vmatpush.msra.mxu0 0.0
        %1392 = vmatpush.msra.mxu0 0.0
        %1393 = vmatpush.msra.mxu0 0.0
        %1394 = vmatpush.msra.mxu0 0.0
        %1395 = vmatpush.msra.mxu0 0.0
        %1396 = vmatpush.msra.mxu0 0.0
        %1397 = vmatpush.msra.mxu0 0.0
        %1398 = vmatpush.msra.mxu0 0.0
        %1399 = vmatpush.msra.mxu0 %v890
        %1400 = vmatmul.f32.gmra.mxu0 %v1382
        %v1401 = vpop.f32.mrf.mxu0
        %v1402 = vadd.f32 0.0, %v1401
        %1403 = vdwg.mxu0
        %v1405 = vsel %vm1140, %v1333, 0
        %1407 = vmatpush.msra.mxu0 0.0
        %1408 = vmatpush.msra.mxu0 0.0
        %1409 = vmatpush.msra.mxu0 0.0
        %1410 = vmatpush.msra.mxu0 0.0
        %1411 = vmatpush.msra.mxu0 0.0
        %1412 = vmatpush.msra.mxu0 0.0
        %1413 = vmatpush.msra.mxu0 0.0
        %1414 = vmatpush.msra.mxu0 0.0
        %1415 = vmatpush.msra.mxu0 0.0
        %1416 = vmatpush.msra.mxu0 0.0
        %1417 = vmatpush.msra.mxu0 0.0
        %1418 = vmatpush.msra.mxu0 0.0
        %1419 = vmatpush.msra.mxu0 0.0
        %1420 = vmatpush.msra.mxu0 0.0
        %1421 = vmatpush.msra.mxu0 0.0
        %1422 = vmatpush.msra.mxu0 %v891
        %1423 = vmatmul.f32.gmra.mxu0 %v1405
        %v1424 = vpop.f32.mrf.mxu0
        %v1425 = vadd.f32 0.0, %v1424
        %1426 = vdwg.mxu0
        %v1428 = vsel %vm1140, %v1356, 0
        %1430 = vmatpush.msra.mxu0 0.0
        %1431 = vmatpush.msra.mxu0 0.0
        %1432 = vmatpush.msra.mxu0 0.0
        %1433 = vmatpush.msra.mxu0 0.0
        %1434 = vmatpush.msra.mxu0 0.0
        %1435 = vmatpush.msra.mxu0 0.0
        %1436 = vmatpush.msra.mxu0 0.0
        %1437 = vmatpush.msra.mxu0 0.0
        %1438 = vmatpush.msra.mxu0 0.0
        %1439 = vmatpush.msra.mxu0 0.0
        %1440 = vmatpush.msra.mxu0 0.0
        %1441 = vmatpush.msra.mxu0 0.0
        %1442 = vmatpush.msra.mxu0 0.0
        %1443 = vmatpush.msra.mxu0 0.0
        %1444 = vmatpush.msra.mxu0 0.0
        %1445 = vmatpush.msra.mxu0 %v892
        %1446 = vmatmul.f32.gmra.mxu0 %v1428
        %v1447 = vpop.f32.mrf.mxu0
        %v1448 = vadd.f32 0.0, %v1447
        %1449 = vdwg.mxu0
        %v1451 = vsel %vm1140, %v1379, 0
        %1453 = vmatpush.msra.mxu0 0.0
        %1454 = vmatpush.msra.mxu0 0.0
        %1455 = vmatpush.msra.mxu0 0.0
        %1456 = vmatpush.msra.mxu0 0.0
        %1457 = vmatpush.msra.mxu0 0.0
        %1458 = vmatpush.msra.mxu0 0.0
        %1459 = vmatpush.msra.mxu0 0.0
        %1460 = vmatpush.msra.mxu0 0.0
        %1461 = vmatpush.msra.mxu0 0.0
        %1462 = vmatpush.msra.mxu0 0.0
        %1463 = vmatpush.msra.mxu0 0.0
        %1464 = vmatpush.msra.mxu0 0.0
        %1465 = vmatpush.msra.mxu0 0.0
        %1466 = vmatpush.msra.mxu0 0.0
        %1467 = vmatpush.msra.mxu0 0.0
        %1468 = vmatpush.msra.mxu0 %v893
        %1469 = vmatmul.f32.gmra.mxu0 %v1451
        %v1470 = vpop.f32.mrf.mxu0
        %v1471 = vadd.f32 0.0, %v1470
        %1472 = vdwg.mxu0
        %v1473 = vsel %vm748, %v1402, 0.0
        %v1474 = vsel %vm748, %v1425, 0.0
        %v1475 = vadd.f32 %v1473, %v1474
        %v1476 = vsel %vm748, %v1448, 0.0
        %v1477 = vadd.f32 %v1475, %v1476
        %v1478 = vsel %vm748, %v1471, 0.0
        %v1479 = vadd.f32 %v1477, %v1478
        %v1480 = vadd.f32 %v744, %v1479
        %v1481 = vld [vmem:[%s714] sm:$0x1]
        %v1483 = vperm.slane %v1481, 0
        %v1485 = vadd.f32 %v1480, %v1483
        %v1486 = vld [vmem:[%s717] sm:$0x1]
        %v1487 = vld [vmem:[%s720] sm:$0x1]
        %v1488 = vsel %vm748, %v1485, 0.0
        %1489 = vadd.xlane.f32.xlu0 %v1488
        %v1490 = vpop.xlane.xlu0 %1489
        %v1491 = vmul.f32 %v1490, %v758
        %v1492 = vsub.f32 %v1485, %v1491
        %v1493 = vmul.f32 %v1492, %v1492
        %v1494 = vsel %vm748, %v1493, 0.0
        %1495 = vadd.xlane.f32.xlu0 %v1494
        %v1496 = vpop.xlane.xlu0 %1495
        %v1497 = vmul.f32 %v1496, %v758
        %v1498 = vadd.f32 %v1497, 1e-05
        %v1499 = vrsqrt.pop %v1498
        %v1500 = vmul.f32 %v1499, %v1498
        %v1501 = vmul.f32 %v1500, %v1499
        %v1502 = vmul.f32 0.5, %v1501
        %v1503 = vsub.f32 1.5, %v1502
        %v1504 = vmul.f32 %v1499, %v1503
        %v1505 = vmul.f32 %v1498, %v1504
        %vm1506 = vcmp.eq.f32.partialorder %v1498, inf
        %v1507 = vsel %vm1506, %v1498, %v1505
        %vm1508 = vcmp.eq.f32.partialorder %v1498, 0.0
        %v1509 = vand.u32 %v1498, 2147483648
        %v1510 = vsel %vm1508, %v1509, %v1507
        %v1511 = vrcp.pop %v1510
        %v1512 = vmul.f32 %v1510, %v1511
        %v1513 = vsub.f32 1.0, %v1512
        %v1514 = vmul.f32 %v1511, %v1513
        %v1515 = vadd.f32 %v1511, %v1514
        %vm1516 = vweird.f32 %v1510
        %vm1517 = vweird.f32 %v1511
        %vm1518 = vmor %vm1516, %vm1517
        %v1519 = vsel %vm1518, %v1511, %v1515
        %v1520 = vand.u32 2147483647, %v1510
        %vm1521 = vcmp.eq.f32.partialorder %v1520, 8.507059e+37
        %v1522 = vand.u32 %v1510, 2147483648
        %v1523 = vor.u32 1.1754944e-38, %v1522
        %v1524 = vsel %vm1521, %v1523, %v1519
        %v1525 = vmul.f32 %v1492, %v1524
        %v1527 = vperm.slane %v1486, 0
        %v1529 = vmul.f32 %v1525, %v1527
        %v1531 = vperm.slane %v1487, 0
        %v1533 = vadd.f32 %v1529, %v1531
        %v1534 = vld [vmem:[%s725] sm:$0xff]
        %v1535 = vld [vmem:[%s725 + $0x8] sm:$0xff]
        %v1536 = vld [vmem:[%s725 + $0x10] sm:$0xff]
        %v1537 = vld [vmem:[%s725 + $0x18] sm:$0xff]
        %v1538 = vld [vmem:[%s728] sm:$0x1]
        %v1540 = vperm.slane %v1538, 0
        %v1543 = vsel %vm748, %v1533, 0
        %1545 = vmatpush.msra.mxu0 0.0
        %1546 = vmatpush.msra.mxu0 0.0
        %1547 = vmatpush.msra.mxu0 0.0
        %1548 = vmatpush.msra.mxu0 0.0
        %1549 = vmatpush.msra.mxu0 0.0
        %1550 = vmatpush.msra.mxu0 0.0
        %1551 = vmatpush.msra.mxu0 0.0
        %1552 = vmatpush.msra.mxu0 0.0
        %1553 = vmatpush.msra.mxu0 0.0
        %1554 = vmatpush.msra.mxu0 0.0
        %1555 = vmatpush.msra.mxu0 0.0
        %1556 = vmatpush.msra.mxu0 0.0
        %1557 = vmatpush.msra.mxu0 %v1537
        %1558 = vmatpush.msra.mxu0 %v1536
        %1559 = vmatpush.msra.mxu0 %v1535
        %1560 = vmatpush.msra.mxu0 %v1534
        %1561 = vmatmul.f32.gmra.mxu0 %v1543
        %v1562 = vpop.f32.mrf.mxu0
        %v1563 = vadd.f32 %v1540, %v1562
        %1564 = vdwg.mxu0
        %v1565 = vmul.f32 %v1563, 0.5
        %v1566 = vmul.f32 %v1563, 0.70710677
        %v1567 = vmul.f32 %v1566, %v1566
        %v1568 = vmin.f32 16.0, %v1567
        %v1569 = vmul.f32 %v1568, 2.1237322e-06
        %v1570 = vadd.f32 %v1569, 0.00028619796
        %v1571 = vmul.f32 %v1568, %v1570
        %v1572 = vadd.f32 %v1571, 0.0036580483
        %v1573 = vmul.f32 %v1568, %v1572
        %v1574 = vadd.f32 %v1573, 0.05243302
        %v1575 = vmul.f32 %v1568, %v1574
        %v1576 = vadd.f32 %v1575, 0.18741608
        %v1577 = vmul.f32 %v1568, %v1576
        %v1578 = vadd.f32 %v1577, 1.1283791
        %v1579 = vmul.f32 %v1566, %v1578
        %v1580 = vmul.f32 %v1568, 3.8918573e-05
        %v1581 = vadd.f32 %v1580, 0.001143296
        %v1582 = vmul.f32 %v1568, %v1581
        %v1583 = vadd.f32 %v1582, 0.014752088
        %v1584 = vmul.f32 %v1568, %v1583
        %v1585 = vadd.f32 %v1584, 0.112945676
        %v1586 = vmul.f32 %v1568, %v1585
        %v1587 = vadd.f32 %v1586, 0.4994258
        %v1588 = vmul.f32 %v1568, %v1587
        %v1589 = vadd.f32 %v1588, 1.0
        %v1590 = vrcp.pop %v1589
        %v1591 = vmul.f32 %v1589, %v1590
        %v1592 = vsub.f32 1.0, %v1591
        %v1593 = vmul.f32 %v1590, %v1592
        %v1594 = vadd.f32 %v1590, %v1593
        %vm1595 = vweird.f32 %v1589
        %vm1596 = vweird.f32 %v1590
        %vm1597 = vmor %vm1595, %vm1596
        %v1598 = vsel %vm1597, %v1590, %v1594
        %v1599 = vand.u32 2147483647, %v1589
        %vm1600 = vcmp.eq.f32.partialorder %v1599, 8.507059e+37
        %v1601 = vand.u32 %v1589, 2147483648
        %v1602 = vor.u32 1.1754944e-38, %v1601
        %v1603 = vsel %vm1600, %v1602, %v1598
        %v1604 = vmul.f32 %v1579, %v1603
        %v1605 = vmin.f32 %v1604, 1.0
        %v1606 = vmax.f32 %v1605, -1.0
        %v1607 = vadd.f32 %v1606, 1.0
        %v1608 = vmul.f32 %v1565, %v1607
        %v1609 = vld [vmem:[%s733] sm:$0xff]
        %v1610 = vld [vmem:[%s733 + $0x8] sm:$0xff]
        %v1611 = vld [vmem:[%s733 + $0x10] sm:$0xff]
        %v1612 = vld [vmem:[%s733 + $0x18] sm:$0xff]
        %v1613 = vld [vmem:[%s733 + $0x20] sm:$0xff]
        %v1614 = vld [vmem:[%s733 + $0x28] sm:$0xff]
        %v1615 = vld [vmem:[%s733 + $0x30] sm:$0xff]
        %v1616 = vld [vmem:[%s733 + $0x38] sm:$0xff]
        %vm1617 = vcmask 523264
        %v1619 = vsel %vm1617, %v1608, 0
        %1621 = vmatpush.msra.mxu0 0.0
        %1622 = vmatpush.msra.mxu0 0.0
        %1623 = vmatpush.msra.mxu0 0.0
        %1624 = vmatpush.msra.mxu0 0.0
        %1625 = vmatpush.msra.mxu0 0.0
        %1626 = vmatpush.msra.mxu0 0.0
        %1627 = vmatpush.msra.mxu0 0.0
        %1628 = vmatpush.msra.mxu0 0.0
        %1629 = vmatpush.msra.mxu0 %v1616
        %1630 = vmatpush.msra.mxu0 %v1615
        %1631 = vmatpush.msra.mxu0 %v1614
        %1632 = vmatpush.msra.mxu0 %v1613
        %1633 = vmatpush.msra.mxu0 %v1612
        %1634 = vmatpush.msra.mxu0 %v1611
        %1635 = vmatpush.msra.mxu0 %v1610
        %1636 = vmatpush.msra.mxu0 %v1609
        %1637 = vmatmul.f32.gmra.mxu0 %v1619
        %v1638 = vpop.f32.mrf.mxu0
        %v1639 = vadd.f32 0.0, %v1638
        %1640 = vdwg.mxu0
        %v1641 = vadd.f32 %v1485, %v1639
        %v1642 = vld [vmem:[%s736] sm:$0x1]
        %v1644 = vperm.slane %v1642, 0
        %v1646 = vadd.f32 %v1641, %v1644
        %1647 = vst.msk [vmem:[#allocation2] sm:$0xff] %vm748, %v1646
        %p1648 = scmp.eq.s32.totalorder %s34, 1
        // Predicated region
        $region85: #{tpu_custom_call.1} parent=79 // pred_check
          %p1649 = pneg %p1648
        $region86: #{tpu_custom_call.1} parent=79 // pred_check_branch
          %1651 = sbr.rel (%p1649) target = $region88
        $region87: #{tpu_custom_call.1} parent=79 // pred_region
          %1652 = vst.msk [vmem:[%s677] sm:$0xff] %vm748, %v1646
        $region88: #{tpu_custom_call.1} parent=79 // pred_fallthru
          _
        %s1653 = sand.u32 %s439, 1
        %s1654 = scalar_lea.sflag [#allocation4], %s1653
        %s1655 = sand.u32 %s439, 1
        %s1656 = smul.addr %s1655, 8
        %s1657 = scalar_lea.vmem [#allocation3], %s1656
        // Predicated region
        $region89: #{tpu_custom_call.1} parent=79 // pred_check
          %p1658 = pneg %p449
        $region90: #{tpu_custom_call.1} parent=79 // pred_check_branch
          %1660 = sbr.rel (%p1658) target = $region92
        $region91: #{tpu_custom_call.1} parent=79 // pred_region
          %1662 = vsyncadd %s1654, 0
          %s1663 = smul.addr %s33, 8
          %s1664 = scalar_lea.hbm %s15, %s1663
          %s1666 = sshll.u32 %s1657, 4
          %s1667 = int_to_ptr.vmem [resolvable:$true] %s1666
          %s1668 = sshll.u32 %s1664, 4
          %s1669 = int_to_ptr.hbm [resolvable:$true] %s1668
          %1671 = dma.vmem_to_hbm [thread:$0]  %s1667, 128, %s1669, %s1654
        $region92: #{tpu_custom_call.1} parent=79 // pred_fallthru
          _
      $region80: #{tpu_custom_call.1} parent=5 // pred_fallthru
        _
      %p1672 = scmp.le.s32.totalorder 2, %s24
      // Predicated region
      $region93: #{tpu_custom_call.1} parent=5 // pred_check
        %p1673 = pneg %p1672
      $region94: #{tpu_custom_call.1} parent=5 // pred_check_branch
        %1675 = sbr.rel (%p1673) target = $region96
      $region95: #{tpu_custom_call.1} parent=5 // pred_region
        %s1676 = ssub.s32 %s24, 2
        // Predicated region
        $region97: #{tpu_custom_call.1} parent=95 // pred_check
          %p1677 = pneg %p455
        $region98: #{tpu_custom_call.1} parent=95 // pred_check_branch
          %1679 = sbr.rel (%p1677) target = $region100
        $region99: #{tpu_custom_call.1} parent=95 // pred_region
          %s1680 = sand.u32 %s440, 1
          %s1681 = scalar_lea.sflag [#allocation4], %s1680
          %s1682 = sand.u32 %s440, 1
          %s1683 = smul.addr %s1682, 8
          %s1684 = scalar_lea.vmem [#allocation3], %s1683
          %1686 = dma.done %s1681, 128
        $region100: #{tpu_custom_call.1} parent=95 // pred_fallthru
          _
      $region96: #{tpu_custom_call.1} parent=5 // pred_fallthru
        _
    $region6: #{tpu_custom_call.1} parent=1 // loop_footer
      %s28 = sadd.s32 1, %s24
    $region7: #{tpu_custom_call.1} parent=1 // loop_footer_branch
      %23 = sbr.rel target = $region3
    $region8: #{tpu_custom_call.1} parent=1 // loop_exit
      _
    %1687 = vsyncpa [#allocation4], 1
    %s1688 = scalar_lea.sflag [#allocation4], 1
    %1689 = vsyncpa %s1688, 1

</llo_original>
